<compile_context>
chip_gen: v7x
topology: tpu7x:2x2x1
jax: 0.10.0
libtpu: 0.0.40
codegen_flags: <defaults>
</compile_context>

<pallas_src>
import numpy as np
import jax
import jax.numpy as jnp
from jax import lax
from jax.experimental import pallas as pl
from jax.experimental.pallas import tpu as pltpu


# ----------------------------------------------------------------------------
# Small helpers shared by operand builder and wrapper.
# ----------------------------------------------------------------------------
def _pad_cin(Cin, W):
    """Smallest Cin_pad >= Cin with W*Cin_pad a multiple of 128 (if it exists)."""
    cp = Cin
    while (W * cp) % 128 != 0 and cp < Cin + 128:
        cp += 1
    return cp if (W * cp) % 128 == 0 else Cin


def _choose_group(B, max_g):
    """Largest divisor of B that is <= max_g (images packed per grid step).

    Note: on v7x (2 TensorCores) prefer G such that B//G >= 2 when B is large;
    for tiny demo batches the MXU-fill win from a bigger G dominates.
    """
    g = 1
    for cand in range(1, min(B, max_g) + 1):
        if B % cand == 0:
            g = cand
    return g


# ----------------------------------------------------------------------------
# Host-side band-matrix (block-Toeplitz) construction.
# ----------------------------------------------------------------------------
def _conv_band_stacked(w_hwio, W):
    """3x3 SAME conv as ONE stacked band matrix.

    out_row[y] = concat(in_row[y-1], in_row[y], in_row[y+1]) @ band,
    band shape (3*W*Cin, W*Cout).  Column shifts, column zero-padding and
    channel mixing are folded in.
    """
    w = np.asarray(w_hwio, np.float32)
    _, _, ci, co = w.shape
    band = np.zeros((3, W * ci, W * co), np.float32)
    for ky in range(3):
        for xo in range(W):
            for kx in range(3):
                xi = xo + kx - 1
                if 0 <= xi < W:
                    band[ky, xi * ci:(xi + 1) * ci, xo * co:(xo + 1) * co] = w[ky, kx]
    return band.reshape(3 * W * ci, W * co)


def _deconv_band(wt, W):
    """ConvTranspose2d(k=3, s=2, p=1, op=1) sub-pixel band matrices.

    wt: (Cin, Cout, 3, 3) (PyTorch ConvTranspose2d layout).
    Returns (3, W*Cin, 2W*Cout): [even rows (ky=1), odd rows term from in[m]
    (ky=2), odd rows term from in[m+1] (ky=0)].
    """
    w = np.asarray(wt, np.float32)
    ci, co = w.shape[0], w.shape[1]

    def col_band(ky):
        bm = np.zeros((W * ci, 2 * W * co), np.float32)
        for ox in range(2 * W):
            for kx in range(3):
                num = ox + 1 - kx            # ox = 2*ix - 1 + kx
                if num % 2 != 0:
                    continue
                ix = num // 2
                if 0 <= ix < W:
                    bm[ix * ci:(ix + 1) * ci, ox * co:(ox + 1) * co] = w[:, :, ky, kx]
        return bm

    return np.stack([col_band(1), col_band(2), col_band(0)])


def build_operands(p, W, Cin, Cout, kp, proj_nums):
    """Precompute all constant kernel operands (stacked bands, tiled biases)."""
    Cin_pad = _pad_cin(Cin, W)
    WCo = W * Cout
    Cup = Cout * kp

    def pad_w(w):                               # zero-pad input channels (HWIO)
        w = np.asarray(w, np.float32)
        if Cin_pad == Cin:
            return w
        pad = np.zeros((3, 3, Cin_pad - Cin, w.shape[-1]), np.float32)
        return np.concatenate([w, pad], axis=2)

    band_id = _conv_band_stacked(pad_w(p["w_id"]), W)       # (3*W*Cin_pad, WCo)
    band_up = _conv_band_stacked(pad_w(p["w_up"]), W)       # (3*W*Cin_pad, W*Cup)

    # Permute up-conv output lanes from (x, cc=o*kp+k) to k-major (k, x, o) so
    # the per-k slabs in the weighted sum are contiguous 128-lane blocks.
    perm = np.empty(kp * WCo, np.int64)
    for k in range(kp):
        for x in range(W):
            for o in range(Cout):
                perm[k * WCo + x * Cout + o] = x * Cup + o * kp + k
    band_up = band_up[:, perm]
    bias_id = np.tile(np.asarray(p["b_id"], np.float32), W)
    bias_up = np.tile(np.asarray(p["b_up"], np.float32), W)[perm]

    bandA = np.concatenate([band_id, band_up], axis=1)       # (3*W*Cin_pad, WCo+kp*WCo)
    biasA = np.concatenate([bias_id, bias_up])[None, :]

    if proj_nums > 0:
        bandP = np.stack([_conv_band_stacked(p["w_proj"][i], W)
                          for i in range(proj_nums)])        # (proj, 3*WCo, WCo)
        biasP = np.stack([np.tile(np.asarray(p["b_proj"][i], np.float32), W)
                          for i in range(proj_nums)])        # (proj, WCo)
    else:                                                     # unused dummies
        bandP = np.zeros((1, 3 * WCo, WCo), np.float32)
        biasP = np.zeros((1, WCo), np.float32)

    bandF = _conv_band_stacked(p["w_fin"], W)                 # (3*WCo, WCo)
    biasF = np.tile(np.asarray(p["b_fin"], np.float32), W)[None, :]

    # Fused deconv band: columns [even | odd], rows [from in[r] ; from in[r+1]].
    d = _deconv_band(p["wt"], W)                              # (3, WCo, 2WCo)
    bandU = np.zeros((2 * WCo, 4 * WCo), np.float32)
    bandU[:WCo, :2 * WCo] = d[0]
    bandU[:WCo, 2 * WCo:] = d[1]
    bandU[WCo:, 2 * WCo:] = d[2]
    bU = np.tile(np.asarray(p["bt"], np.float32), 2 * W)
    biasU = np.concatenate([bU, bU])[None, :]

    ops = {k: jnp.asarray(v, jnp.bfloat16)
           for k, v in dict(bandA=bandA, bandP=bandP, bandF=bandF, bandU=bandU).items()}
    ops.update({k: jnp.asarray(v, jnp.float32)
                for k, v in dict(biasA=biasA, biasP=biasP, biasF=biasF, biasU=biasU).items()})
    return ops


# ----------------------------------------------------------------------------
# Fused QCUpBlock2d kernel (G images per grid step, row-stacked).
# ----------------------------------------------------------------------------
def _make_kernel(H, W, Cin_pad, Cout, kp, proj_nums, act, G):
    R = H + 1                   # image rows + 1 shared zero separator row
    M = G * R                   # matmul M-dimension per grid step
    WCo = W * Cout
    bf16 = jnp.bfloat16

    def activ(v):
        if act == "relu":
            return jnp.maximum(v, 0.0)
        if act == "leakyrelu":
            return jnp.where(v >= 0, v, 0.1 * v)
        return v * jax.nn.sigmoid(v)            # swish

    def kernel(x_ref, w_ref, mask_ref,
               bandA_ref, biasA_ref, bandP_ref, biasP_ref,
               bandF_ref, biasF_ref, bandU_ref, biasU_ref,
               o_ref, pad_mid):
        # Re-zero only the 2 group-border rows of the persistent padded scratch
        # (interior rows are fully overwritten before being read every step).
        z = jnp.zeros((1, WCo), jnp.float32)
        pad_mid[0:1, :] = z
        pad_mid[M + 1:M + 2, :] = z

        mask = mask_ref[...]                    # (M, WCo): 0 at separator rows

        def conv3(x3, band, bias):
            # One MXU matmul per conv stage: bf16 operands, f32 accumulate.
            return jnp.dot(x3.astype(bf16), band,
                           preferred_element_type=jnp.float32) + bias

        # ---- identity conv + up_channel conv fused into ONE matmul ------------
        xin = x_ref[0]                          # (M+2, W*Cin_pad), host-padded
        xa = jnp.concatenate([xin[0:M], xin[1:M + 1], xin[2:M + 2]], axis=1)
        accA = conv3(xa, bandA_ref[...], biasA_ref[...])     # (M, WCo + kp*WCo)
        identity = accA[:, :WCo]

        # ---- motion-norm weighted sum over kp (slab-by-slab) -------------------
        # Weights are pre-expanded on the host and zero at separator rows, so the
        # result is automatically zero there.
        wts = w_ref[0]                          # (M, kp*WCo), k-major lanes
        res = accA[:, WCo:2 * WCo] * wts[:, 0:WCo]
        for k in range(1, kp):
            res = res + accA[:, (k + 1) * WCo:(k + 2) * WCo] * wts[:, k * WCo:(k + 1) * WCo]

        # ---- proj convs (+activation), ONE matmul each --------------------------
        for pidx in range(proj_nums):
            pad_mid[1:M + 1, :] = res
            xp = jnp.concatenate([pad_mid[0:M, :], res, pad_mid[2:M + 2, :]], axis=1)
            res = activ(conv3(xp, bandP_ref[pidx], biasP_ref[pidx:pidx + 1, :])) * mask

        # ---- final conv ----------------------------------------------------------
        pad_mid[1:M + 1, :] = res
        xf = jnp.concatenate([pad_mid[0:M, :], res, pad_mid[2:M + 2, :]], axis=1)
        res = conv3(xf, bandF_ref[...], biasF_ref[...])

        total = (identity + res) * mask          # residual add, zero separators

        # ---- ConvTranspose2d(k=3,s=2,p=1,op=1): even+odd rows in ONE matmul ------
        pad_mid[1:M + 1, :] = total
        xu = jnp.concatenate([total, pad_mid[2:M + 2, :]], axis=1)   # [in[r] | in[r+1]]
        out = conv3(xu, bandU_ref[...], biasU_ref[...])              # (M, 4*WCo)
        o_ref[0] = out.astype(o_ref.dtype)

    return kernel


def qc_up_block_forward(feature_maps, sparse_motion, ops, *, Cout, proj_nums,
                        act="relu", images_per_step=8):
    """feature_maps: (B, Cin, H, W) NCHW; sparse_motion: (B, kp, H, W, 2)."""
    B, Cin, H, W = feature_maps.shape
    kp = sparse_motion.shape[1]
    assert sparse_motion.shape[2:4] == (H, W)   # TODO(synk): Resize branch unsupported
    Cin_pad = _pad_cin(Cin, W)
    WCp, WCo = W * Cin_pad, W * Cout
    G = _choose_group(B, images_per_step)
    NG = B // G
    R = H + 1
    M = G * R

    # ---- host-side layout prep: lane-dense slabs, separator rows pre-zeroed ----
    x = jnp.transpose(feature_maps, (0, 2, 3, 1)).astype(jnp.float32)   # NHWC
    if Cin_pad > Cin:
        x = jnp.pad(x, ((0, 0), (0, 0), (0, 0), (0, Cin_pad - Cin)))
    x = x.reshape(B, H, WCp)
    x = jnp.pad(x, ((0, 0), (0, 1), (0, 0)))         # per-image bottom zero row
    x = x.reshape(NG, M, WCp)
    x = jnp.pad(x, ((0, 0), (1, 1), (0, 0)))         # per-group top/bottom border

    # Expanded motion weights: ||sm||_2 replicated over Cout, k-major lanes,
    # zero at separator rows (sqrt + expansion moved out of the kernel).
    smn = jnp.sqrt(jnp.sum(sparse_motion.astype(jnp.float32) ** 2, axis=-1))  # (B,kp,H,W)
    wts = jnp.transpose(smn, (0, 2, 1, 3))                                    # (B,H,kp,W)
    wts = jnp.broadcast_to(wts[..., None], (B, H, kp, W, Cout)).reshape(B, H, kp * WCo)
    wts = jnp.pad(wts, ((0, 0), (0, 1), (0, 0))).reshape(NG, M, kp * WCo)

    # 0/1 row mask (zero at separator rows), full 128-lane width.
    rm = np.ones((M, 1), np.float32)
    rm[np.arange(M) % R == H] = 0.0
    rowmask = jnp.asarray(np.repeat(rm, WCo, axis=1))

    inputs = [x, wts, rowmask,
              ops["bandA"], ops["biasA"], ops["bandP"], ops["biasP"],
              ops["bandF"], ops["biasF"], ops["bandU"], ops["biasU"]]

    def cspec(a):
        nd = a.ndim
        return pl.BlockSpec(a.shape, lambda n, _nd=nd: (0,) * _nd)

    in_specs = [pl.BlockSpec((1, M + 2, WCp), lambda n: (n, 0, 0)),
                pl.BlockSpec((1, M, kp * WCo), lambda n: (n, 0, 0))]
    in_specs += [cspec(a) for a in inputs[2:]]

    kernel = _make_kernel(H, W, Cin_pad, Cout, kp, proj_nums, act, G)
    out = pl.pallas_call(
        kernel,
        out_shape=jax.ShapeDtypeStruct((NG, M, 4 * WCo), jnp.float32),
        grid_spec=pltpu.PrefetchScalarGridSpec(
            num_scalar_prefetch=0,
            grid=(NG,),
            in_specs=in_specs,
            out_specs=pl.BlockSpec((1, M, 4 * WCo), lambda n: (n, 0, 0)),
            scratch_shapes=[pltpu.VMEM((M + 2, WCo), jnp.float32)]),
        compiler_params=pltpu.CompilerParams(dimension_semantics=("parallel",)),
    )(*inputs)

    # (NG, M, 4W*Cout) lanes=[even|odd] -> NCHW (B, Cout, 2H, 2W); drop the
    # separator rows and interleave even/odd rows in the same XLA transpose.
    out = out.reshape(NG, G, R, 2, 2 * W, Cout)[:, :, :H]
    out = jnp.transpose(out, (0, 1, 5, 2, 3, 4)).reshape(B, Cout, 2 * H, 2 * W)
    return out


# ----------------------------------------------------------------------------
# Parameter init (deterministic, synthetic, PyTorch-layout-compatible).
# ----------------------------------------------------------------------------
def init_params(key, Cin, Cout, kp, proj_nums):
    ks = list(jax.random.split(key, 8 + 2 * proj_nums))

    def wconv(k, ci, co):                       # HWIO
        return 0.1 * jax.random.normal(k, (3, 3, ci, co), jnp.float32)

    p = {}
    p["w_id"] = wconv(ks[0], Cin, Cout)
    p["b_id"] = 0.05 * jax.random.normal(ks[1], (Cout,), jnp.float32)
    p["w_up"] = wconv(ks[2], Cin, Cout * kp)
    p["b_up"] = 0.05 * jax.random.normal(ks[3], (Cout * kp,), jnp.float32)
    p["w_proj"], p["b_proj"] = [], []
    for i in range(proj_nums):
        p["w_proj"].append(wconv(ks[4 + 2 * i], Cout, Cout))
        p["b_proj"].append(0.05 * jax.random.normal(ks[5 + 2 * i], (Cout,), jnp.float32))
    p["w_fin"] = wconv(ks[4 + 2 * proj_nums], Cout, Cout)
    p["b_fin"] = 0.05 * jax.random.normal(ks[5 + 2 * proj_nums], (Cout,), jnp.float32)
    # ConvTranspose2d weight layout: (in_channels, out_channels, kH, kW)
    p["wt"] = 0.1 * jax.random.normal(ks[6 + 2 * proj_nums], (Cout, Cout, 3, 3), jnp.float32)
    p["bt"] = 0.05 * jax.random.normal(ks[7 + 2 * proj_nums], (Cout,), jnp.float32)
    return p


# ----------------------------------------------------------------------------
# Pure-JAX reference (same semantics) for the correctness check.
# ----------------------------------------------------------------------------
def _ref_forward(feature_maps, sparse_motion, p, proj_nums, act="relu"):
    B, Cin, H, W = feature_maps.shape
    Cout = p["b_id"].shape[0]
    x = jnp.transpose(feature_maps, (0, 2, 3, 1)).astype(jnp.float32)

    def conv(v, w, b):
        return lax.conv_general_dilated(
            v, w, (1, 1), "SAME",
            dimension_numbers=("NHWC", "HWIO", "NHWC")) + b

    def activ(v):
        if act == "relu":
            return jnp.maximum(v, 0.0)
        if act == "leakyrelu":
            return jnp.where(v >= 0, v, 0.1 * v)
        return v * jax.nn.sigmoid(v)

    identity = conv(x, p["w_id"], p["b_id"])
    up = conv(x, p["w_up"], p["b_up"])                                       # (B,H,W,Cout*kp)
    smn = jnp.sqrt(jnp.sum(sparse_motion.astype(jnp.float32) ** 2, axis=-1))  # (B,kp,H,W)
    smn = jnp.transpose(smn, (0, 2, 3, 1))                                    # (B,H,W,kp)
    kp = smn.shape[-1]
    up5 = up.reshape(B, H, W, Cout, kp)
    res = jnp.sum(up5 * smn[..., None, :], axis=-1)                           # (B,H,W,Cout)
    for i in range(proj_nums):
        res = activ(conv(res, p["w_proj"][i], p["b_proj"][i]))
    res = conv(res, p["w_fin"], p["b_fin"])
    tot = identity + res
    # ConvTranspose2d(k=3,s=2,p=1,op=1) == lhs-dilated conv with flipped kernel.
    rhs = jnp.transpose(p["wt"][:, :, ::-1, ::-1], (2, 3, 0, 1))              # HWIO
    out = lax.conv_general_dilated(
        tot, rhs, (1, 1), ((1, 2), (1, 2)), lhs_dilation=(2, 2),
        dimension_numbers=("NHWC", "HWIO", "NHWC")) + p["bt"]
    return jnp.transpose(out, (0, 3, 1, 2))


if __name__ == "__main__":
    key = jax.random.PRNGKey(0)
    kx, ksm, kparams, kx2, ksm2 = jax.random.split(key, 5)

    # QCUpBlock2d(in_channels=4, out_channels=8, kp_nums=4, proj_nums=2,
    #             activate_type='relu', up_type='conv')
    Cin, Cout, kp, proj_nums, H, W = 4, 8, 4, 2, 16, 16
    act = "relu"

    params = init_params(kparams, Cin, Cout, kp, proj_nums)
    ops = build_operands(params, W, Cin, Cout, kp, proj_nums)

    fwd = jax.jit(lambda fm, sm: qc_up_block_forward(
        fm, sm, ops, Cout=Cout, proj_nums=proj_nums, act=act))

    def check(B, kfm, ksp):
        fm = jax.random.normal(kfm, (B, Cin, H, W), jnp.float32)          # NCHW
        sm = jax.random.normal(ksp, (B, kp, H, W, 2), jnp.float32)        # (B,kp,H,W,2)
        out = jax.block_until_ready(fwd(fm, sm))
        ref = jax.block_until_ready(_ref_forward(fm, sm, params, proj_nums, act))
        assert out.shape == (B, Cout, 2 * H, 2 * W), out.shape
        # bf16 MXU operands vs f32 reference -> slightly widened atol.
        np.testing.assert_allclose(np.asarray(out), np.asarray(ref),
                                   rtol=2e-2, atol=3e-2)

    check(2, kx, ksm)     # small batch (2 images packed into one grid step)
    check(8, kx2, ksm2)   # exercises the full 8-image / M=136 packing path

    print("KERNEL_OK")
</pallas_src>

<mosaic_0001>
module attributes {stable_mosaic.version = 11 : i64} {
  func.func @kernel(%arg0: i32, %arg1: memref<1x36x128xf32, #tpu.memory_space<vmem>>, %arg2: memref<1x34x512xf32, #tpu.memory_space<vmem>>, %arg3: memref<34x128xf32, #tpu.memory_space<vmem>>, %arg4: memref<384x640xbf16, #tpu.memory_space<vmem>>, %arg5: memref<1x640xf32, #tpu.memory_space<vmem>>, %arg6: memref<2x384x128xbf16, #tpu.memory_space<vmem>>, %arg7: memref<2x128xf32, #tpu.memory_space<vmem>>, %arg8: memref<384x128xbf16, #tpu.memory_space<vmem>>, %arg9: memref<1x128xf32, #tpu.memory_space<vmem>>, %arg10: memref<256x512xbf16, #tpu.memory_space<vmem>>, %arg11: memref<1x512xf32, #tpu.memory_space<vmem>>, %arg12: memref<1x34x512xf32, #tpu.memory_space<vmem>>, %arg13: memref<36x128xf32, #tpu.memory_space<vmem>>) attributes {dimension_semantics = [#tpu.dimension_semantics<parallel>], iteration_bounds = array<i64: 1>, scalar_prefetch = 0 : i64, scratch_operands = 1 : i64, tpu.core_type = #tpu.core_type<tc>, window_params = [{transform_indices = @transform_0, window_bounds = array<i64: 1, 36, 128>}, {transform_indices = @transform_1, window_bounds = array<i64: 1, 34, 512>}, {pipeline_mode = #tpu.pipeline_mode<synchronous>, transform_indices = @transform_2, window_bounds = array<i64: 34, 128>}, {pipeline_mode = #tpu.pipeline_mode<synchronous>, transform_indices = @transform_3, window_bounds = array<i64: 384, 640>}, {pipeline_mode = #tpu.pipeline_mode<synchronous>, transform_indices = @transform_4, window_bounds = array<i64: 1, 640>}, {pipeline_mode = #tpu.pipeline_mode<synchronous>, transform_indices = @transform_5, window_bounds = array<i64: 2, 384, 128>}, {pipeline_mode = #tpu.pipeline_mode<synchronous>, transform_indices = @transform_6, window_bounds = array<i64: 2, 128>}, {pipeline_mode = #tpu.pipeline_mode<synchronous>, transform_indices = @transform_7, window_bounds = array<i64: 384, 128>}, {pipeline_mode = #tpu.pipeline_mode<synchronous>, transform_indices = @transform_8, window_bounds = array<i64: 1, 128>}, {pipeline_mode = #tpu.pipeline_mode<synchronous>, transform_indices = @transform_9, window_bounds = array<i64: 256, 512>}, {pipeline_mode = #tpu.pipeline_mode<synchronous>, transform_indices = @transform_10, window_bounds = array<i64: 1, 512>}, {transform_indices = @transform_11, window_bounds = array<i64: 1, 34, 512>}]} {
    %cst = arith.constant 0.000000e+00 : f32
    %0 = vector.broadcast %cst : f32 to vector<1x128xf32>
    %c0 = arith.constant 0 : index
    %c0_0 = arith.constant 0 : index
    %1 = vector.load %arg13[%c0, %c0_0] : memref<36x128xf32, #tpu.memory_space<vmem>>, vector<1x128xf32>
    tpu.vector_store %arg13[%c0, %c0_0], %0 {strides = array<i32>} : memref<36x128xf32, #tpu.memory_space<vmem>>, vector<1x128xf32>,
    %c35 = arith.constant 35 : index
    %c0_1 = arith.constant 0 : index
    %2 = vector.load %arg13[%c35, %c0_1] : memref<36x128xf32, #tpu.memory_space<vmem>>, vector<1x128xf32>
    tpu.vector_store %arg13[%c35, %c0_1], %0 {strides = array<i32>} : memref<36x128xf32, #tpu.memory_space<vmem>>, vector<1x128xf32>,
    %c0_2 = arith.constant 0 : index
    %c0_3 = arith.constant 0 : index
    %3 = vector.load %arg3[%c0_2, %c0_3] : memref<34x128xf32, #tpu.memory_space<vmem>>, vector<34x128xf32>
    %c0_4 = arith.constant 0 : index
    %c0_5 = arith.constant 0 : index
    %c0_6 = arith.constant 0 : index
    %4 = vector.load %arg1[%c0_4, %c0_5, %c0_6] : memref<1x36x128xf32, #tpu.memory_space<vmem>>, vector<1x36x128xf32>
    %5 = vector.shape_cast %4 : vector<1x36x128xf32> to vector<36x128xf32>
    %6 = vector.extract_strided_slice %5 {offsets = [0, 0], sizes = [34, 128], strides = [1, 1]} : vector<36x128xf32> to vector<34x128xf32>
    %7 = vector.extract_strided_slice %5 {offsets = [1, 0], sizes = [34, 128], strides = [1, 1]} : vector<36x128xf32> to vector<34x128xf32>
    %8 = vector.extract_strided_slice %5 {offsets = [2, 0], sizes = [34, 128], strides = [1, 1]} : vector<36x128xf32> to vector<34x128xf32>
    %9 = tpu.concatenate %6, %7, %8 in 1 : vector<34x128xf32>, vector<34x128xf32>, vector<34x128xf32> -> vector<34x384xf32>
    %c0_7 = arith.constant 0 : index
    %c0_8 = arith.constant 0 : index
    %10 = vector.load %arg4[%c0_7, %c0_8] : memref<384x640xbf16, #tpu.memory_space<vmem>>, vector<384x640xbf16>
    %c0_9 = arith.constant 0 : index
    %c0_10 = arith.constant 0 : index
    %11 = vector.load %arg5[%c0_9, %c0_10] : memref<1x640xf32, #tpu.memory_space<vmem>>, vector<1x640xf32>
    %12 = arith.truncf %9 : vector<34x384xf32> to vector<34x384xbf16>
    %cst_11 = arith.constant dense<0.000000e+00> : vector<34x640xf32>
    %13 = tpu.matmul %12, %10, %cst_11 {dimension_numbers = #tpu.dot_dimension_numbers<[1], [0], [0], [1], [0, 0, 1, 1], [], []>} : vector<34x384xbf16>, vector<384x640xbf16>, vector<34x640xf32> -> vector<34x640xf32>
    %14 = vector.broadcast %11 : vector<1x640xf32> to vector<34x640xf32>
    %15 = arith.addf %13, %14 : vector<34x640xf32>
    %16 = vector.extract_strided_slice %15 {offsets = [0, 0], sizes = [34, 128], strides = [1, 1]} : vector<34x640xf32> to vector<34x128xf32>
    %c0_12 = arith.constant 0 : index
    %c0_13 = arith.constant 0 : index
    %c0_14 = arith.constant 0 : index
    %17 = vector.load %arg2[%c0_12, %c0_13, %c0_14] : memref<1x34x512xf32, #tpu.memory_space<vmem>>, vector<1x34x512xf32>
    %18 = vector.shape_cast %17 : vector<1x34x512xf32> to vector<34x512xf32>
    %19 = vector.extract_strided_slice %15 {offsets = [0, 128], sizes = [34, 128], strides = [1, 1]} : vector<34x640xf32> to vector<34x128xf32>
    %20 = vector.extract_strided_slice %18 {offsets = [0, 0], sizes = [34, 128], strides = [1, 1]} : vector<34x512xf32> to vector<34x128xf32>
    %21 = arith.mulf %19, %20 : vector<34x128xf32>
    %22 = vector.extract_strided_slice %15 {offsets = [0, 256], sizes = [34, 128], strides = [1, 1]} : vector<34x640xf32> to vector<34x128xf32>
    %23 = vector.extract_strided_slice %18 {offsets = [0, 128], sizes = [34, 128], strides = [1, 1]} : vector<34x512xf32> to vector<34x128xf32>
    %24 = arith.mulf %22, %23 : vector<34x128xf32>
    %25 = arith.addf %21, %24 : vector<34x128xf32>
    %26 = vector.extract_strided_slice %15 {offsets = [0, 384], sizes = [34, 128], strides = [1, 1]} : vector<34x640xf32> to vector<34x128xf32>
    %27 = vector.extract_strided_slice %18 {offsets = [0, 256], sizes = [34, 128], strides = [1, 1]} : vector<34x512xf32> to vector<34x128xf32>
    %28 = arith.mulf %26, %27 : vector<34x128xf32>
    %29 = arith.addf %25, %28 : vector<34x128xf32>
    %30 = vector.extract_strided_slice %15 {offsets = [0, 512], sizes = [34, 128], strides = [1, 1]} : vector<34x640xf32> to vector<34x128xf32>
    %31 = vector.extract_strided_slice %18 {offsets = [0, 384], sizes = [34, 128], strides = [1, 1]} : vector<34x512xf32> to vector<34x128xf32>
    %32 = arith.mulf %30, %31 : vector<34x128xf32>
    %33 = arith.addf %29, %32 : vector<34x128xf32>
    %c1 = arith.constant 1 : index
    %c0_15 = arith.constant 0 : index
    %34 = vector.load %arg13[%c1, %c0_15] : memref<36x128xf32, #tpu.memory_space<vmem>>, vector<34x128xf32>
    tpu.vector_store %arg13[%c1, %c0_15], %33 {strides = array<i32>} : memref<36x128xf32, #tpu.memory_space<vmem>>, vector<34x128xf32>,
    %c0_16 = arith.constant 0 : index
    %c0_17 = arith.constant 0 : index
    %35 = vector.load %arg13[%c0_16, %c0_17] : memref<36x128xf32, #tpu.memory_space<vmem>>, vector<34x128xf32>
    %c2 = arith.constant 2 : index
    %c0_18 = arith.constant 0 : index
    %36 = vector.load %arg13[%c2, %c0_18] : memref<36x128xf32, #tpu.memory_space<vmem>>, vector<34x128xf32>
    %37 = tpu.concatenate %35, %33, %36 in 1 : vector<34x128xf32>, vector<34x128xf32>, vector<34x128xf32> -> vector<34x384xf32>
    %c0_19 = arith.constant 0 : index
    %c0_20 = arith.constant 0 : index
    %c0_21 = arith.constant 0 : index
    %38 = vector.load %arg6[%c0_19, %c0_20, %c0_21] : memref<2x384x128xbf16, #tpu.memory_space<vmem>>, vector<1x384x128xbf16>
    %39 = vector.shape_cast %38 : vector<1x384x128xbf16> to vector<384x128xbf16>
    %c0_22 = arith.constant 0 : index
    %c0_23 = arith.constant 0 : index
    %40 = vector.load %arg7[%c0_22, %c0_23] : memref<2x128xf32, #tpu.memory_space<vmem>>, vector<1x128xf32>
    %41 = arith.truncf %37 : vector<34x384xf32> to vector<34x384xbf16>
    %cst_24 = arith.constant dense<0.000000e+00> : vector<34x128xf32>
    %42 = tpu.matmul %41, %39, %cst_24 {dimension_numbers = #tpu.dot_dimension_numbers<[1], [0], [0], [1], [0, 0, 1, 1], [], []>} : vector<34x384xbf16>, vector<384x128xbf16>, vector<34x128xf32> -> vector<34x128xf32>
    %43 = vector.broadcast %40 : vector<1x128xf32> to vector<34x128xf32>
    %44 = arith.addf %42, %43 : vector<34x128xf32>
    %cst_25 = arith.constant 0.000000e+00 : f32
    %45 = vector.broadcast %cst_25 : f32 to vector<34x128xf32>
    %46 = arith.maximumf %44, %45 : vector<34x128xf32>
    %47 = arith.mulf %46, %3 : vector<34x128xf32>
    %c1_26 = arith.constant 1 : index
    %c0_27 = arith.constant 0 : index
    %48 = vector.load %arg13[%c1_26, %c0_27] : memref<36x128xf32, #tpu.memory_space<vmem>>, vector<34x128xf32>
    tpu.vector_store %arg13[%c1_26, %c0_27], %47 {strides = array<i32>} : memref<36x128xf32, #tpu.memory_space<vmem>>, vector<34x128xf32>,
    %c0_28 = arith.constant 0 : index
    %c0_29 = arith.constant 0 : index
    %49 = vector.load %arg13[%c0_28, %c0_29] : memref<36x128xf32, #tpu.memory_space<vmem>>, vector<34x128xf32>
    %c2_30 = arith.constant 2 : index
    %c0_31 = arith.constant 0 : index
    %50 = vector.load %arg13[%c2_30, %c0_31] : memref<36x128xf32, #tpu.memory_space<vmem>>, vector<34x128xf32>
    %51 = tpu.concatenate %49, %47, %50 in 1 : vector<34x128xf32>, vector<34x128xf32>, vector<34x128xf32> -> vector<34x384xf32>
    %c1_32 = arith.constant 1 : index
    %c0_33 = arith.constant 0 : index
    %c0_34 = arith.constant 0 : index
    %52 = vector.load %arg6[%c1_32, %c0_33, %c0_34] : memref<2x384x128xbf16, #tpu.memory_space<vmem>>, vector<1x384x128xbf16>
    %53 = vector.shape_cast %52 : vector<1x384x128xbf16> to vector<384x128xbf16>
    %c1_35 = arith.constant 1 : index
    %c0_36 = arith.constant 0 : index
    %54 = vector.load %arg7[%c1_35, %c0_36] : memref<2x128xf32, #tpu.memory_space<vmem>>, vector<1x128xf32>
    %55 = arith.truncf %51 : vector<34x384xf32> to vector<34x384xbf16>
    %cst_37 = arith.constant dense<0.000000e+00> : vector<34x128xf32>
    %56 = tpu.matmul %55, %53, %cst_37 {dimension_numbers = #tpu.dot_dimension_numbers<[1], [0], [0], [1], [0, 0, 1, 1], [], []>} : vector<34x384xbf16>, vector<384x128xbf16>, vector<34x128xf32> -> vector<34x128xf32>
    %57 = vector.broadcast %54 : vector<1x128xf32> to vector<34x128xf32>
    %58 = arith.addf %56, %57 : vector<34x128xf32>
    %cst_38 = arith.constant 0.000000e+00 : f32
    %59 = vector.broadcast %cst_38 : f32 to vector<34x128xf32>
    %60 = arith.maximumf %58, %59 : vector<34x128xf32>
    %61 = arith.mulf %60, %3 : vector<34x128xf32>
    %c1_39 = arith.constant 1 : index
    %c0_40 = arith.constant 0 : index
    %62 = vector.load %arg13[%c1_39, %c0_40] : memref<36x128xf32, #tpu.memory_space<vmem>>, vector<34x128xf32>
    tpu.vector_store %arg13[%c1_39, %c0_40], %61 {strides = array<i32>} : memref<36x128xf32, #tpu.memory_space<vmem>>, vector<34x128xf32>,
    %c0_41 = arith.constant 0 : index
    %c0_42 = arith.constant 0 : index
    %63 = vector.load %arg13[%c0_41, %c0_42] : memref<36x128xf32, #tpu.memory_space<vmem>>, vector<34x128xf32>
    %c2_43 = arith.constant 2 : index
    %c0_44 = arith.constant 0 : index
    %64 = vector.load %arg13[%c2_43, %c0_44] : memref<36x128xf32, #tpu.memory_space<vmem>>, vector<34x128xf32>
    %65 = tpu.concatenate %63, %61, %64 in 1 : vector<34x128xf32>, vector<34x128xf32>, vector<34x128xf32> -> vector<34x384xf32>
    %c0_45 = arith.constant 0 : index
    %c0_46 = arith.constant 0 : index
    %66 = vector.load %arg8[%c0_45, %c0_46] : memref<384x128xbf16, #tpu.memory_space<vmem>>, vector<384x128xbf16>
    %c0_47 = arith.constant 0 : index
    %c0_48 = arith.constant 0 : index
    %67 = vector.load %arg9[%c0_47, %c0_48] : memref<1x128xf32, #tpu.memory_space<vmem>>, vector<1x128xf32>
    %68 = arith.truncf %65 : vector<34x384xf32> to vector<34x384xbf16>
    %cst_49 = arith.constant dense<0.000000e+00> : vector<34x128xf32>
    %69 = tpu.matmul %68, %66, %cst_49 {dimension_numbers = #tpu.dot_dimension_numbers<[1], [0], [0], [1], [0, 0, 1, 1], [], []>} : vector<34x384xbf16>, vector<384x128xbf16>, vector<34x128xf32> -> vector<34x128xf32>
    %70 = vector.broadcast %67 : vector<1x128xf32> to vector<34x128xf32>
    %71 = arith.addf %69, %70 : vector<34x128xf32>
    %72 = arith.addf %16, %71 : vector<34x128xf32>
    %73 = arith.mulf %72, %3 : vector<34x128xf32>
    %c1_50 = arith.constant 1 : index
    %c0_51 = arith.constant 0 : index
    %74 = vector.load %arg13[%c1_50, %c0_51] : memref<36x128xf32, #tpu.memory_space<vmem>>, vector<34x128xf32>
    tpu.vector_store %arg13[%c1_50, %c0_51], %73 {strides = array<i32>} : memref<36x128xf32, #tpu.memory_space<vmem>>, vector<34x128xf32>,
    %c2_52 = arith.constant 2 : index
    %c0_53 = arith.constant 0 : index
    %75 = vector.load %arg13[%c2_52, %c0_53] : memref<36x128xf32, #tpu.memory_space<vmem>>, vector<34x128xf32>
    %76 = tpu.concatenate %73, %75 in 1 : vector<34x128xf32>, vector<34x128xf32> -> vector<34x256xf32>
    %c0_54 = arith.constant 0 : index
    %c0_55 = arith.constant 0 : index
    %77 = vector.load %arg10[%c0_54, %c0_55] : memref<256x512xbf16, #tpu.memory_space<vmem>>, vector<256x512xbf16>
    %c0_56 = arith.constant 0 : index
    %c0_57 = arith.constant 0 : index
    %78 = vector.load %arg11[%c0_56, %c0_57] : memref<1x512xf32, #tpu.memory_space<vmem>>, vector<1x512xf32>
    %79 = arith.truncf %76 : vector<34x256xf32> to vector<34x256xbf16>
    %cst_58 = arith.constant dense<0.000000e+00> : vector<34x512xf32>
    %80 = tpu.matmul %79, %77, %cst_58 {dimension_numbers = #tpu.dot_dimension_numbers<[1], [0], [0], [1], [0, 0, 1, 1], [], []>} : vector<34x256xbf16>, vector<256x512xbf16>, vector<34x512xf32> -> vector<34x512xf32>
    %81 = vector.broadcast %78 : vector<1x512xf32> to vector<34x512xf32>
    %82 = arith.addf %80, %81 : vector<34x512xf32>
    %c0_59 = arith.constant 0 : index
    %c0_60 = arith.constant 0 : index
    %c0_61 = arith.constant 0 : index
    %83 = vector.load %arg12[%c0_59, %c0_60, %c0_61] : memref<1x34x512xf32, #tpu.memory_space<vmem>>, vector<1x34x512xf32>
    %84 = vector.shape_cast %83 : vector<1x34x512xf32> to vector<34x512xf32>
    %85 = vector.shape_cast %82 : vector<34x512xf32> to vector<1x34x512xf32>
    tpu.vector_store %arg12[%c0_59, %c0_60, %c0_61], %85 {strides = array<i32>} : memref<1x34x512xf32, #tpu.memory_space<vmem>>, vector<1x34x512xf32>,
    return
  }
  func.func @transform_0(%arg0: i32) -> (i32, i32, i32) {
    %c0_i32 = arith.constant 0 : i32
    %c0_i32_0 = arith.constant 0 : i32
    %c0_i32_1 = arith.constant 0 : i32
    return %arg0, %c0_i32, %c0_i32_0 : i32, i32, i32
  }
  func.func @transform_1(%arg0: i32) -> (i32, i32, i32) {
    %c0_i32 = arith.constant 0 : i32
    %c0_i32_0 = arith.constant 0 : i32
    %c0_i32_1 = arith.constant 0 : i32
    return %arg0, %c0_i32, %c0_i32_0 : i32, i32, i32
  }
  func.func @transform_2(%arg0: i32) -> (i32, i32) {
    %c0_i32 = arith.constant 0 : i32
    %c0_i32_0 = arith.constant 0 : i32
    %c0_i32_1 = arith.constant 0 : i32
    return %c0_i32, %c0_i32_0 : i32, i32
  }
  func.func @transform_3(%arg0: i32) -> (i32, i32) {
    %c0_i32 = arith.constant 0 : i32
    %c0_i32_0 = arith.constant 0 : i32
    %c0_i32_1 = arith.constant 0 : i32
    return %c0_i32, %c0_i32_0 : i32, i32
  }
  func.func @transform_4(%arg0: i32) -> (i32, i32) {
    %c0_i32 = arith.constant 0 : i32
    %c0_i32_0 = arith.constant 0 : i32
    %c0_i32_1 = arith.constant 0 : i32
    return %c0_i32, %c0_i32_0 : i32, i32
  }
  func.func @transform_5(%arg0: i32) -> (i32, i32, i32) {
    %c0_i32 = arith.constant 0 : i32
    %c0_i32_0 = arith.constant 0 : i32
    %c0_i32_1 = arith.constant 0 : i32
    %c0_i32_2 = arith.constant 0 : i32
    return %c0_i32, %c0_i32_0, %c0_i32_1 : i32, i32, i32
  }
  func.func @transform_6(%arg0: i32) -> (i32, i32) {
    %c0_i32 = arith.constant 0 : i32
    %c0_i32_0 = arith.constant 0 : i32
    %c0_i32_1 = arith.constant 0 : i32
    return %c0_i32, %c0_i32_0 : i32, i32
  }
  func.func @transform_7(%arg0: i32) -> (i32, i32) {
    %c0_i32 = arith.constant 0 : i32
    %c0_i32_0 = arith.constant 0 : i32
    %c0_i32_1 = arith.constant 0 : i32
    return %c0_i32, %c0_i32_0 : i32, i32
  }
  func.func @transform_8(%arg0: i32) -> (i32, i32) {
    %c0_i32 = arith.constant 0 : i32
    %c0_i32_0 = arith.constant 0 : i32
    %c0_i32_1 = arith.constant 0 : i32
    return %c0_i32, %c0_i32_0 : i32, i32
  }
  func.func @transform_9(%arg0: i32) -> (i32, i32) {
    %c0_i32 = arith.constant 0 : i32
    %c0_i32_0 = arith.constant 0 : i32
    %c0_i32_1 = arith.constant 0 : i32
    return %c0_i32, %c0_i32_0 : i32, i32
  }
  func.func @transform_10(%arg0: i32) -> (i32, i32) {
    %c0_i32 = arith.constant 0 : i32
    %c0_i32_0 = arith.constant 0 : i32
    %c0_i32_1 = arith.constant 0 : i32
    return %c0_i32, %c0_i32_0 : i32, i32
  }
  func.func @transform_11(%arg0: i32) -> (i32, i32, i32) {
    %c0_i32 = arith.constant 0 : i32
    %c0_i32_0 = arith.constant 0 : i32
    %c0_i32_1 = arith.constant 0 : i32
    return %arg0, %c0_i32, %c0_i32_0 : i32, i32, i32
  }
}

</mosaic_0001>

<llo_original>
// kernel: _lambda_.1
$region0: #{_lambda_.1}
  #allocation0 [shape = 'u32[]', space=smem, size = 0x4, offset = 0x4, fixed_abs, tag = 'smem constant byte address 0x4 - core index']
  #allocation1 [shape = 'u32[144,128]{1,0:T(1,128)}', space=vmem, size = 0x12000, scoped, tag = 'internal scratch']
  #allocation2 [shape = 'f32[36,128]{1,0:T(8,128)}', space=vmem, size = 0x5000, scoped, tag = 'scratch operand']
  %s0 = inlined_call_operand.vmem [shape: f32[1,36,128], index: 0, kind: input, shape index: {}]
  %s1 = inlined_call_operand.vmem [shape: f32[1,34,512], index: 1, kind: input, shape index: {}]
  %s2 = inlined_call_operand.vmem [shape: f32[34,128], index: 2, kind: input, shape index: {}]
  %s3 = inlined_call_operand.vmem [shape: bf16[384,640], index: 3, kind: input, shape index: {}]
  %s4 = inlined_call_operand.vmem [shape: f32[1,640], index: 4, kind: input, shape index: {}]
  %s5 = inlined_call_operand.vmem [shape: bf16[2,384,128], index: 5, kind: input, shape index: {}]
  %s6 = inlined_call_operand.vmem [shape: f32[2,128], index: 6, kind: input, shape index: {}]
  %s7 = inlined_call_operand.vmem [shape: bf16[384,128], index: 7, kind: input, shape index: {}]
  %s8 = inlined_call_operand.vmem [shape: f32[1,128], index: 8, kind: input, shape index: {}]
  %s9 = inlined_call_operand.vmem [shape: bf16[256,512], index: 9, kind: input, shape index: {}]
  %s10 = inlined_call_operand.vmem [shape: f32[1,512], index: 10, kind: input, shape index: {}]
  %s11 = inlined_call_operand.vmem [shape: f32[1,34,512], index: 11, kind: output, shape index: {}]
  %s12 = sld [smem:[#allocation0]]
  $region54: #{_lambda_.1} parent=0
    _
  %s14 = ssub.s32 1, %s12
  %s15 = scalar_select 0, %s14, %s12
  // Predicated region
  $region2: #{_lambda_.1} parent=0 // pred_check
    _
  $region3: #{_lambda_.1} parent=0 // pred_check_branch
    %17 = sbr.rel (0) target = $region5
  $region4: #{_lambda_.1} parent=0 // pred_region
    _
  $region5: #{_lambda_.1} parent=0 // pred_fallthru
    _
  // Predicated region
  $region6: #{_lambda_.1} parent=0 // pred_check
    _
  $region7: #{_lambda_.1} parent=0 // pred_check_branch
    %19 = sbr.rel (0) target = $region9
  $region8: #{_lambda_.1} parent=0 // pred_region
    _
  $region9: #{_lambda_.1} parent=0 // pred_fallthru
    _
  // Predicated region
  $region10: #{_lambda_.1} parent=0 // pred_check
    _
  $region11: #{_lambda_.1} parent=0 // pred_check_branch
    %21 = sbr.rel (0) target = $region13
  $region12: #{_lambda_.1} parent=0 // pred_region
    _
  $region13: #{_lambda_.1} parent=0 // pred_fallthru
    _
  // Predicated region
  $region14: #{_lambda_.1} parent=0 // pred_check
    _
  $region15: #{_lambda_.1} parent=0 // pred_check_branch
    %23 = sbr.rel (0) target = $region17
  $region16: #{_lambda_.1} parent=0 // pred_region
    _
  $region17: #{_lambda_.1} parent=0 // pred_fallthru
    _
  // Predicated region
  $region18: #{_lambda_.1} parent=0 // pred_check
    _
  $region19: #{_lambda_.1} parent=0 // pred_check_branch
    %25 = sbr.rel (0) target = $region21
  $region20: #{_lambda_.1} parent=0 // pred_region
    _
  $region21: #{_lambda_.1} parent=0 // pred_fallthru
    _
  // Predicated region
  $region22: #{_lambda_.1} parent=0 // pred_check
    _
  $region23: #{_lambda_.1} parent=0 // pred_check_branch
    %27 = sbr.rel (0) target = $region25
  $region24: #{_lambda_.1} parent=0 // pred_region
    _
  $region25: #{_lambda_.1} parent=0 // pred_fallthru
    _
  // Predicated region
  $region26: #{_lambda_.1} parent=0 // pred_check
    _
  $region27: #{_lambda_.1} parent=0 // pred_check_branch
    %29 = sbr.rel (0) target = $region29
  $region28: #{_lambda_.1} parent=0 // pred_region
    _
  $region29: #{_lambda_.1} parent=0 // pred_fallthru
    _
  // Predicated region
  $region30: #{_lambda_.1} parent=0 // pred_check
    _
  $region31: #{_lambda_.1} parent=0 // pred_check_branch
    %31 = sbr.rel (0) target = $region33
  $region32: #{_lambda_.1} parent=0 // pred_region
    _
  $region33: #{_lambda_.1} parent=0 // pred_fallthru
    _
  // Predicated region
  $region34: #{_lambda_.1} parent=0 // pred_check
    _
  $region35: #{_lambda_.1} parent=0 // pred_check_branch
    %33 = sbr.rel (0) target = $region37
  $region36: #{_lambda_.1} parent=0 // pred_region
    _
  $region37: #{_lambda_.1} parent=0 // pred_fallthru
    _
  // Predicated region
  $region38: #{_lambda_.1} parent=0 // pred_check
    _
  $region39: #{_lambda_.1} parent=0 // pred_check_branch
    %35 = sbr.rel (0) target = $region41
  $region40: #{_lambda_.1} parent=0 // pred_region
    _
  $region41: #{_lambda_.1} parent=0 // pred_fallthru
    _
  // Predicated region
  $region42: #{_lambda_.1} parent=0 // pred_check
    _
  $region43: #{_lambda_.1} parent=0 // pred_check_branch
    %37 = sbr.rel (0) target = $region45
  $region44: #{_lambda_.1} parent=0 // pred_region
    _
  $region45: #{_lambda_.1} parent=0 // pred_fallthru
    _
  %39 = vst [vmem:[#allocation2] sm:$0x1] 0.0
  %40 = vst [vmem:[#allocation2 + $0x23] sm:$0x1] 0.0
  %v41 = vld [vmem:[%s2] sm:$0xff]
  %v42 = vld [vmem:[%s2 + $0x8] sm:$0xff]
  %v43 = vld [vmem:[%s2 + $0x10] sm:$0xff]
  %v44 = vld [vmem:[%s2 + $0x18] sm:$0xff]
  %v45 = vld [vmem:[%s2 + $0x20] sm:$0x3]
  %v46 = vld [vmem:[%s0] sm:$0xff]
  %v47 = vld [vmem:[%s0 + $0x8] sm:$0xff]
  %v48 = vld [vmem:[%s0 + $0x10] sm:$0xff]
  %v49 = vld [vmem:[%s0 + $0x18] sm:$0xff]
  %v50 = vld [vmem:[%s0 + $0x20] sm:$0xf]
  %vm56 = vcmask 1046528
  %v57 = vrot.slane %v46, 1
  %v58 = vrot.slane %v47, 1
  %v59 = vsel %vm56, %v57, %v58
  %v60 = vrot.slane %v48, 1
  %v61 = vsel %vm56, %v58, %v60
  %v62 = vrot.slane %v49, 1
  %v63 = vsel %vm56, %v60, %v62
  %v64 = vrot.slane %v50, 1
  %v65 = vsel %vm56, %v62, %v64
  %vm71 = vcmask 1045504
  %v72 = vrot.slane %v46, 2
  %v73 = vrot.slane %v47, 2
  %v74 = vsel %vm71, %v72, %v73
  %v75 = vrot.slane %v48, 2
  %v76 = vsel %vm71, %v73, %v75
  %v77 = vrot.slane %v49, 2
  %v78 = vsel %vm71, %v75, %v77
  %v79 = vrot.slane %v50, 2
  %v80 = vsel %vm71, %v77, %v79
  %v86 = vld [vmem:[%s3] sm:$0xff]
  %v87 = vld [vmem:[%s3 + $0x8] sm:$0xff]
  %v88 = vld [vmem:[%s3 + $0x10] sm:$0xf]
  %v89 = vld [vmem:[%s3 + $0x14] sm:$0xff]
  %v90 = vld [vmem:[%s3 + $0x1c] sm:$0xff]
  %v91 = vld [vmem:[%s3 + $0x24] sm:$0xf]
  %v92 = vld [vmem:[%s3 + $0x28] sm:$0xff]
  %v93 = vld [vmem:[%s3 + $0x30] sm:$0xff]
  %v94 = vld [vmem:[%s3 + $0x38] sm:$0xf]
  %v95 = vld [vmem:[%s3 + $0x3c] sm:$0xff]
  %v96 = vld [vmem:[%s3 + $0x44] sm:$0xff]
  %v97 = vld [vmem:[%s3 + $0x4c] sm:$0xf]
  %v98 = vld [vmem:[%s3 + $0x50] sm:$0xff]
  %v99 = vld [vmem:[%s3 + $0x58] sm:$0xff]
  %v100 = vld [vmem:[%s3 + $0x60] sm:$0xf]
  %v101 = vld [vmem:[%s3 + $0x64] sm:$0xff]
  %v102 = vld [vmem:[%s3 + $0x6c] sm:$0xff]
  %v103 = vld [vmem:[%s3 + $0x74] sm:$0xf]
  %v104 = vld [vmem:[%s3 + $0x78] sm:$0xff]
  %v105 = vld [vmem:[%s3 + $0x80] sm:$0xff]
  %v106 = vld [vmem:[%s3 + $0x88] sm:$0xf]
  %v107 = vld [vmem:[%s3 + $0x8c] sm:$0xff]
  %v108 = vld [vmem:[%s3 + $0x94] sm:$0xff]
  %v109 = vld [vmem:[%s3 + $0x9c] sm:$0xf]
  %v110 = vld [vmem:[%s3 + $0xa0] sm:$0xff]
  %v111 = vld [vmem:[%s3 + $0xa8] sm:$0xff]
  %v112 = vld [vmem:[%s3 + $0xb0] sm:$0xf]
  %v113 = vld [vmem:[%s3 + $0xb4] sm:$0xff]
  %v114 = vld [vmem:[%s3 + $0xbc] sm:$0xff]
  %v115 = vld [vmem:[%s3 + $0xc4] sm:$0xf]
  %v116 = vld [vmem:[%s3 + $0xc8] sm:$0xff]
  %v117 = vld [vmem:[%s3 + $0xd0] sm:$0xff]
  %v118 = vld [vmem:[%s3 + $0xd8] sm:$0xf]
  %v119 = vld [vmem:[%s3 + $0xdc] sm:$0xff]
  %v120 = vld [vmem:[%s3 + $0xe4] sm:$0xff]
  %v121 = vld [vmem:[%s3 + $0xec] sm:$0xf]
  %v122 = vld [vmem:[%s3 + $0xf0] sm:$0xff]
  %v123 = vld [vmem:[%s3 + $0xf8] sm:$0xff]
  %v124 = vld [vmem:[%s3 + $0x100] sm:$0xf]
  %v125 = vld [vmem:[%s3 + $0x104] sm:$0xff]
  %v126 = vld [vmem:[%s3 + $0x10c] sm:$0xff]
  %v127 = vld [vmem:[%s3 + $0x114] sm:$0xf]
  %v128 = vld [vmem:[%s3 + $0x118] sm:$0xff]
  %v129 = vld [vmem:[%s3 + $0x120] sm:$0xff]
  %v130 = vld [vmem:[%s3 + $0x128] sm:$0xf]
  %v131 = vld [vmem:[%s3 + $0x12c] sm:$0xff]
  %v132 = vld [vmem:[%s3 + $0x134] sm:$0xff]
  %v133 = vld [vmem:[%s3 + $0x13c] sm:$0xf]
  %v134 = vld [vmem:[%s3 + $0x140] sm:$0xff]
  %v135 = vld [vmem:[%s3 + $0x148] sm:$0xff]
  %v136 = vld [vmem:[%s3 + $0x150] sm:$0xf]
  %v137 = vld [vmem:[%s3 + $0x154] sm:$0xff]
  %v138 = vld [vmem:[%s3 + $0x15c] sm:$0xff]
  %v139 = vld [vmem:[%s3 + $0x164] sm:$0xf]
  %v140 = vld [vmem:[%s3 + $0x168] sm:$0xff]
  %v141 = vld [vmem:[%s3 + $0x170] sm:$0xff]
  %v142 = vld [vmem:[%s3 + $0x178] sm:$0xf]
  %v143 = vld [vmem:[%s3 + $0x17c] sm:$0xff]
  %v144 = vld [vmem:[%s3 + $0x184] sm:$0xff]
  %v145 = vld [vmem:[%s3 + $0x18c] sm:$0xf]
  %v146 = vld [vmem:[%s3 + $0x190] sm:$0xff]
  %v147 = vld [vmem:[%s3 + $0x198] sm:$0xff]
  %v148 = vld [vmem:[%s3 + $0x1a0] sm:$0xf]
  %v149 = vld [vmem:[%s3 + $0x1a4] sm:$0xff]
  %v150 = vld [vmem:[%s3 + $0x1ac] sm:$0xff]
  %v151 = vld [vmem:[%s3 + $0x1b4] sm:$0xf]
  %v152 = vld [vmem:[%s3 + $0x1b8] sm:$0xff]
  %v153 = vld [vmem:[%s3 + $0x1c0] sm:$0xff]
  %v154 = vld [vmem:[%s3 + $0x1c8] sm:$0xf]
  %v155 = vld [vmem:[%s3 + $0x1cc] sm:$0xff]
  %v156 = vld [vmem:[%s3 + $0x1d4] sm:$0xff]
  %v157 = vld [vmem:[%s3 + $0x1dc] sm:$0xf]
  %v158 = vld [vmem:[%s3 + $0x1e0] sm:$0xff]
  %v159 = vld [vmem:[%s3 + $0x1e8] sm:$0xff]
  %v160 = vld [vmem:[%s3 + $0x1f0] sm:$0xf]
  %v161 = vld [vmem:[%s3 + $0x1f4] sm:$0xff]
  %v162 = vld [vmem:[%s3 + $0x1fc] sm:$0xff]
  %v163 = vld [vmem:[%s3 + $0x204] sm:$0xf]
  %v164 = vld [vmem:[%s3 + $0x208] sm:$0xff]
  %v165 = vld [vmem:[%s3 + $0x210] sm:$0xff]
  %v166 = vld [vmem:[%s3 + $0x218] sm:$0xf]
  %v167 = vld [vmem:[%s3 + $0x21c] sm:$0xff]
  %v168 = vld [vmem:[%s3 + $0x224] sm:$0xff]
  %v169 = vld [vmem:[%s3 + $0x22c] sm:$0xf]
  %v170 = vld [vmem:[%s3 + $0x230] sm:$0xff]
  %v171 = vld [vmem:[%s3 + $0x238] sm:$0xff]
  %v172 = vld [vmem:[%s3 + $0x240] sm:$0xf]
  %v173 = vld [vmem:[%s3 + $0x244] sm:$0xff]
  %v174 = vld [vmem:[%s3 + $0x24c] sm:$0xff]
  %v175 = vld [vmem:[%s3 + $0x254] sm:$0xf]
  %v176 = vld [vmem:[%s3 + $0x258] sm:$0xff]
  %v177 = vld [vmem:[%s3 + $0x260] sm:$0xff]
  %v178 = vld [vmem:[%s3 + $0x268] sm:$0xf]
  %v179 = vld [vmem:[%s3 + $0x26c] sm:$0xff]
  %v180 = vld [vmem:[%s3 + $0x274] sm:$0xff]
  %v181 = vld [vmem:[%s3 + $0x27c] sm:$0xf]
  %v182 = vld [vmem:[%s3 + $0x280] sm:$0xff]
  %v183 = vld [vmem:[%s3 + $0x288] sm:$0xff]
  %v184 = vld [vmem:[%s3 + $0x290] sm:$0xf]
  %v185 = vld [vmem:[%s3 + $0x294] sm:$0xff]
  %v186 = vld [vmem:[%s3 + $0x29c] sm:$0xff]
  %v187 = vld [vmem:[%s3 + $0x2a4] sm:$0xf]
  %v188 = vld [vmem:[%s3 + $0x2a8] sm:$0xff]
  %v189 = vld [vmem:[%s3 + $0x2b0] sm:$0xff]
  %v190 = vld [vmem:[%s3 + $0x2b8] sm:$0xf]
  %v191 = vld [vmem:[%s3 + $0x2bc] sm:$0xff]
  %v192 = vld [vmem:[%s3 + $0x2c4] sm:$0xff]
  %v193 = vld [vmem:[%s3 + $0x2cc] sm:$0xf]
  %v194 = vld [vmem:[%s3 + $0x2d0] sm:$0xff]
  %v195 = vld [vmem:[%s3 + $0x2d8] sm:$0xff]
  %v196 = vld [vmem:[%s3 + $0x2e0] sm:$0xf]
  %v197 = vld [vmem:[%s3 + $0x2e4] sm:$0xff]
  %v198 = vld [vmem:[%s3 + $0x2ec] sm:$0xff]
  %v199 = vld [vmem:[%s3 + $0x2f4] sm:$0xf]
  %v200 = vld [vmem:[%s3 + $0x2f8] sm:$0xff]
  %v201 = vld [vmem:[%s3 + $0x300] sm:$0xff]
  %v202 = vld [vmem:[%s3 + $0x308] sm:$0xf]
  %v203 = vld [vmem:[%s3 + $0x30c] sm:$0xff]
  %v204 = vld [vmem:[%s3 + $0x314] sm:$0xff]
  %v205 = vld [vmem:[%s3 + $0x31c] sm:$0xf]
  %v206 = vld [vmem:[%s3 + $0x320] sm:$0xff]
  %v207 = vld [vmem:[%s3 + $0x328] sm:$0xff]
  %v208 = vld [vmem:[%s3 + $0x330] sm:$0xf]
  %v209 = vld [vmem:[%s3 + $0x334] sm:$0xff]
  %v210 = vld [vmem:[%s3 + $0x33c] sm:$0xff]
  %v211 = vld [vmem:[%s3 + $0x344] sm:$0xf]
  %v212 = vld [vmem:[%s3 + $0x348] sm:$0xff]
  %v213 = vld [vmem:[%s3 + $0x350] sm:$0xff]
  %v214 = vld [vmem:[%s3 + $0x358] sm:$0xf]
  %v215 = vld [vmem:[%s3 + $0x35c] sm:$0xff]
  %v216 = vld [vmem:[%s3 + $0x364] sm:$0xff]
  %v217 = vld [vmem:[%s3 + $0x36c] sm:$0xf]
  %v218 = vld [vmem:[%s3 + $0x370] sm:$0xff]
  %v219 = vld [vmem:[%s3 + $0x378] sm:$0xff]
  %v220 = vld [vmem:[%s3 + $0x380] sm:$0xf]
  %v221 = vld [vmem:[%s3 + $0x384] sm:$0xff]
  %v222 = vld [vmem:[%s3 + $0x38c] sm:$0xff]
  %v223 = vld [vmem:[%s3 + $0x394] sm:$0xf]
  %v224 = vld [vmem:[%s3 + $0x398] sm:$0xff]
  %v225 = vld [vmem:[%s3 + $0x3a0] sm:$0xff]
  %v226 = vld [vmem:[%s3 + $0x3a8] sm:$0xf]
  %v227 = vld [vmem:[%s3 + $0x3ac] sm:$0xff]
  %v228 = vld [vmem:[%s3 + $0x3b4] sm:$0xff]
  %v229 = vld [vmem:[%s3 + $0x3bc] sm:$0xf]
  %v230 = vld [vmem:[%s4] sm:$0x1f]
  %v231 = vpack.c.bf16 %v47, %v46
  %v232 = vpack.c.bf16 %v61, %v59
  %v233 = vpack.c.bf16 %v76, %v74
  %v234 = vpack.c.bf16 %v49, %v48
  %v235 = vpack.c.bf16 %v65, %v63
  %v236 = vpack.c.bf16 %v80, %v78
  %v237 = vpack.c.bf16 %v50, %v50
  %v238 = vpack.c.bf16 %v64, %v64
  %v239 = vpack.c.bf16 %v79, %v79
  %v241 = vlaneseq
  %v242 = vshrl.u32 %v241, 7
  %v243 = vsub.s32 0, %v242
  %v244 = vrot.slane %v230, %v243
  %v245 = vlaneseq
  %v246 = vshrl.u32 %v245, 7
  %v247 = vsub.s32 1, %v246
  %v248 = vrot.slane %v230, %v247
  %v249 = vlaneseq
  %v250 = vshrl.u32 %v249, 7
  %v251 = vsub.s32 2, %v250
  %v252 = vrot.slane %v230, %v251
  %v253 = vlaneseq
  %v254 = vshrl.u32 %v253, 7
  %v255 = vsub.s32 3, %v254
  %v256 = vrot.slane %v230, %v255
  %v257 = vlaneseq
  %v258 = vshrl.u32 %v257, 7
  %v259 = vsub.s32 4, %v258
  %v260 = vrot.slane %v230, %v259
  %v410 = vunpack.c.l.b16 %v86
  %v411 = vunpack.c.h.b16 %v86
  %v412 = vunpack.c.l.b16 %v87
  %v413 = vunpack.c.h.b16 %v87
  %v414 = vunpack.c.l.b16 %v88
  %v415 = vunpack.c.l.b16 %v89
  %v416 = vunpack.c.h.b16 %v89
  %v417 = vunpack.c.l.b16 %v90
  %v418 = vunpack.c.h.b16 %v90
  %v419 = vunpack.c.l.b16 %v91
  %v420 = vunpack.c.l.b16 %v92
  %v421 = vunpack.c.h.b16 %v92
  %v422 = vunpack.c.l.b16 %v93
  %v423 = vunpack.c.h.b16 %v93
  %v424 = vunpack.c.l.b16 %v94
  %v425 = vunpack.c.l.b16 %v95
  %v426 = vunpack.c.h.b16 %v95
  %v427 = vunpack.c.l.b16 %v96
  %v428 = vunpack.c.h.b16 %v96
  %v429 = vunpack.c.l.b16 %v97
  %v430 = vunpack.c.l.b16 %v98
  %v431 = vunpack.c.h.b16 %v98
  %v432 = vunpack.c.l.b16 %v99
  %v433 = vunpack.c.h.b16 %v99
  %v434 = vunpack.c.l.b16 %v100
  %v435 = vunpack.c.l.b16 %v101
  %v436 = vunpack.c.h.b16 %v101
  %v437 = vunpack.c.l.b16 %v102
  %v438 = vunpack.c.h.b16 %v102
  %v439 = vunpack.c.l.b16 %v103
  %v440 = vunpack.c.l.b16 %v104
  %v441 = vunpack.c.h.b16 %v104
  %v442 = vunpack.c.l.b16 %v105
  %v443 = vunpack.c.h.b16 %v105
  %v444 = vunpack.c.l.b16 %v106
  %v445 = vunpack.c.l.b16 %v107
  %v446 = vunpack.c.h.b16 %v107
  %v447 = vunpack.c.l.b16 %v108
  %v448 = vunpack.c.h.b16 %v108
  %v449 = vunpack.c.l.b16 %v109
  %v450 = vunpack.c.l.b16 %v110
  %v451 = vunpack.c.h.b16 %v110
  %v452 = vunpack.c.l.b16 %v111
  %v453 = vunpack.c.h.b16 %v111
  %v454 = vunpack.c.l.b16 %v112
  %v455 = vunpack.c.l.b16 %v113
  %v456 = vunpack.c.h.b16 %v113
  %v457 = vunpack.c.l.b16 %v114
  %v458 = vunpack.c.h.b16 %v114
  %v459 = vunpack.c.l.b16 %v115
  %v460 = vunpack.c.l.b16 %v116
  %v461 = vunpack.c.h.b16 %v116
  %v462 = vunpack.c.l.b16 %v117
  %v463 = vunpack.c.h.b16 %v117
  %v464 = vunpack.c.l.b16 %v118
  %v465 = vunpack.c.l.b16 %v119
  %v466 = vunpack.c.h.b16 %v119
  %v467 = vunpack.c.l.b16 %v120
  %v468 = vunpack.c.h.b16 %v120
  %v469 = vunpack.c.l.b16 %v121
  %v470 = vunpack.c.l.b16 %v122
  %v471 = vunpack.c.h.b16 %v122
  %v472 = vunpack.c.l.b16 %v123
  %v473 = vunpack.c.h.b16 %v123
  %v474 = vunpack.c.l.b16 %v124
  %v475 = vunpack.c.l.b16 %v125
  %v476 = vunpack.c.h.b16 %v125
  %v477 = vunpack.c.l.b16 %v126
  %v478 = vunpack.c.h.b16 %v126
  %v479 = vunpack.c.l.b16 %v127
  %v480 = vunpack.c.l.b16 %v128
  %v481 = vunpack.c.h.b16 %v128
  %v482 = vunpack.c.l.b16 %v129
  %v483 = vunpack.c.h.b16 %v129
  %v484 = vunpack.c.l.b16 %v130
  %v485 = vunpack.c.l.b16 %v131
  %v486 = vunpack.c.h.b16 %v131
  %v487 = vunpack.c.l.b16 %v132
  %v488 = vunpack.c.h.b16 %v132
  %v489 = vunpack.c.l.b16 %v133
  %v490 = vunpack.c.l.b16 %v134
  %v491 = vunpack.c.h.b16 %v134
  %v492 = vunpack.c.l.b16 %v135
  %v493 = vunpack.c.h.b16 %v135
  %v494 = vunpack.c.l.b16 %v136
  %v495 = vunpack.c.l.b16 %v137
  %v496 = vunpack.c.h.b16 %v137
  %v497 = vunpack.c.l.b16 %v138
  %v498 = vunpack.c.h.b16 %v138
  %v499 = vunpack.c.l.b16 %v139
  %v500 = vunpack.c.l.b16 %v140
  %v501 = vunpack.c.h.b16 %v140
  %v502 = vunpack.c.l.b16 %v141
  %v503 = vunpack.c.h.b16 %v141
  %v504 = vunpack.c.l.b16 %v142
  %v505 = vunpack.c.l.b16 %v143
  %v506 = vunpack.c.h.b16 %v143
  %v507 = vunpack.c.l.b16 %v144
  %v508 = vunpack.c.h.b16 %v144
  %v509 = vunpack.c.l.b16 %v145
  %v510 = vunpack.c.l.b16 %v146
  %v511 = vunpack.c.h.b16 %v146
  %v512 = vunpack.c.l.b16 %v147
  %v513 = vunpack.c.h.b16 %v147
  %v514 = vunpack.c.l.b16 %v148
  %v515 = vunpack.c.l.b16 %v149
  %v516 = vunpack.c.h.b16 %v149
  %v517 = vunpack.c.l.b16 %v150
  %v518 = vunpack.c.h.b16 %v150
  %v519 = vunpack.c.l.b16 %v151
  %v520 = vunpack.c.l.b16 %v152
  %v521 = vunpack.c.h.b16 %v152
  %v522 = vunpack.c.l.b16 %v153
  %v523 = vunpack.c.h.b16 %v153
  %v524 = vunpack.c.l.b16 %v154
  %v525 = vunpack.c.l.b16 %v155
  %v526 = vunpack.c.h.b16 %v155
  %v527 = vunpack.c.l.b16 %v156
  %v528 = vunpack.c.h.b16 %v156
  %v529 = vunpack.c.l.b16 %v157
  %v530 = vunpack.c.l.b16 %v158
  %v531 = vunpack.c.h.b16 %v158
  %v532 = vunpack.c.l.b16 %v159
  %v533 = vunpack.c.h.b16 %v159
  %v534 = vunpack.c.l.b16 %v160
  %v535 = vunpack.c.l.b16 %v161
  %v536 = vunpack.c.h.b16 %v161
  %v537 = vunpack.c.l.b16 %v162
  %v538 = vunpack.c.h.b16 %v162
  %v539 = vunpack.c.l.b16 %v163
  %v540 = vunpack.c.l.b16 %v164
  %v541 = vunpack.c.h.b16 %v164
  %v542 = vunpack.c.l.b16 %v165
  %v543 = vunpack.c.h.b16 %v165
  %v544 = vunpack.c.l.b16 %v166
  %v545 = vunpack.c.l.b16 %v167
  %v546 = vunpack.c.h.b16 %v167
  %v547 = vunpack.c.l.b16 %v168
  %v548 = vunpack.c.h.b16 %v168
  %v549 = vunpack.c.l.b16 %v169
  %v550 = vunpack.c.l.b16 %v170
  %v551 = vunpack.c.h.b16 %v170
  %v552 = vunpack.c.l.b16 %v171
  %v553 = vunpack.c.h.b16 %v171
  %v554 = vunpack.c.l.b16 %v172
  %v555 = vunpack.c.l.b16 %v173
  %v556 = vunpack.c.h.b16 %v173
  %v557 = vunpack.c.l.b16 %v174
  %v558 = vunpack.c.h.b16 %v174
  %v559 = vunpack.c.l.b16 %v175
  %v560 = vunpack.c.l.b16 %v176
  %v561 = vunpack.c.h.b16 %v176
  %v562 = vunpack.c.l.b16 %v177
  %v563 = vunpack.c.h.b16 %v177
  %v564 = vunpack.c.l.b16 %v178
  %v565 = vunpack.c.l.b16 %v179
  %v566 = vunpack.c.h.b16 %v179
  %v567 = vunpack.c.l.b16 %v180
  %v568 = vunpack.c.h.b16 %v180
  %v569 = vunpack.c.l.b16 %v181
  %v570 = vunpack.c.l.b16 %v182
  %v571 = vunpack.c.h.b16 %v182
  %v572 = vunpack.c.l.b16 %v183
  %v573 = vunpack.c.h.b16 %v183
  %v574 = vunpack.c.l.b16 %v184
  %v575 = vunpack.c.l.b16 %v185
  %v576 = vunpack.c.h.b16 %v185
  %v577 = vunpack.c.l.b16 %v186
  %v578 = vunpack.c.h.b16 %v186
  %v579 = vunpack.c.l.b16 %v187
  %v580 = vunpack.c.l.b16 %v188
  %v581 = vunpack.c.h.b16 %v188
  %v582 = vunpack.c.l.b16 %v189
  %v583 = vunpack.c.h.b16 %v189
  %v584 = vunpack.c.l.b16 %v190
  %v585 = vunpack.c.l.b16 %v191
  %v586 = vunpack.c.h.b16 %v191
  %v587 = vunpack.c.l.b16 %v192
  %v588 = vunpack.c.h.b16 %v192
  %v589 = vunpack.c.l.b16 %v193
  %v590 = vunpack.c.l.b16 %v194
  %v591 = vunpack.c.h.b16 %v194
  %v592 = vunpack.c.l.b16 %v195
  %v593 = vunpack.c.h.b16 %v195
  %v594 = vunpack.c.l.b16 %v196
  %v595 = vunpack.c.l.b16 %v197
  %v596 = vunpack.c.h.b16 %v197
  %v597 = vunpack.c.l.b16 %v198
  %v598 = vunpack.c.h.b16 %v198
  %v599 = vunpack.c.l.b16 %v199
  %v600 = vunpack.c.l.b16 %v200
  %v601 = vunpack.c.h.b16 %v200
  %v602 = vunpack.c.l.b16 %v201
  %v603 = vunpack.c.h.b16 %v201
  %v604 = vunpack.c.l.b16 %v202
  %v605 = vunpack.c.l.b16 %v203
  %v606 = vunpack.c.h.b16 %v203
  %v607 = vunpack.c.l.b16 %v204
  %v608 = vunpack.c.h.b16 %v204
  %v609 = vunpack.c.l.b16 %v205
  %v610 = vunpack.c.l.b16 %v206
  %v611 = vunpack.c.h.b16 %v206
  %v612 = vunpack.c.l.b16 %v207
  %v613 = vunpack.c.h.b16 %v207
  %v614 = vunpack.c.l.b16 %v208
  %v615 = vunpack.c.l.b16 %v209
  %v616 = vunpack.c.h.b16 %v209
  %v617 = vunpack.c.l.b16 %v210
  %v618 = vunpack.c.h.b16 %v210
  %v619 = vunpack.c.l.b16 %v211
  %v620 = vunpack.c.l.b16 %v212
  %v621 = vunpack.c.h.b16 %v212
  %v622 = vunpack.c.l.b16 %v213
  %v623 = vunpack.c.h.b16 %v213
  %v624 = vunpack.c.l.b16 %v214
  %v625 = vunpack.c.l.b16 %v215
  %v626 = vunpack.c.h.b16 %v215
  %v627 = vunpack.c.l.b16 %v216
  %v628 = vunpack.c.h.b16 %v216
  %v629 = vunpack.c.l.b16 %v217
  %v630 = vunpack.c.l.b16 %v218
  %v631 = vunpack.c.h.b16 %v218
  %v632 = vunpack.c.l.b16 %v219
  %v633 = vunpack.c.h.b16 %v219
  %v634 = vunpack.c.l.b16 %v220
  %v635 = vunpack.c.l.b16 %v221
  %v636 = vunpack.c.h.b16 %v221
  %v637 = vunpack.c.l.b16 %v222
  %v638 = vunpack.c.h.b16 %v222
  %v639 = vunpack.c.l.b16 %v223
  %v640 = vunpack.c.l.b16 %v224
  %v641 = vunpack.c.h.b16 %v224
  %v642 = vunpack.c.l.b16 %v225
  %v643 = vunpack.c.h.b16 %v225
  %v644 = vunpack.c.l.b16 %v226
  %v645 = vunpack.c.l.b16 %v227
  %v646 = vunpack.c.h.b16 %v227
  %v647 = vunpack.c.l.b16 %v228
  %v648 = vunpack.c.h.b16 %v228
  %v649 = vunpack.c.l.b16 %v229
  %v650 = vpack.c.b16 %v415, %v410
  %v651 = vpack.c.b16 %v416, %v411
  %v652 = vpack.c.b16 %v417, %v412
  %v653 = vpack.c.b16 %v418, %v413
  %v654 = vpack.c.b16 %v419, %v414
  %v655 = vpack.c.b16 %v425, %v420
  %v656 = vpack.c.b16 %v426, %v421
  %v657 = vpack.c.b16 %v427, %v422
  %v658 = vpack.c.b16 %v428, %v423
  %v659 = vpack.c.b16 %v429, %v424
  %v660 = vpack.c.b16 %v435, %v430
  %v661 = vpack.c.b16 %v436, %v431
  %v662 = vpack.c.b16 %v437, %v432
  %v663 = vpack.c.b16 %v438, %v433
  %v664 = vpack.c.b16 %v439, %v434
  %v665 = vpack.c.b16 %v445, %v440
  %v666 = vpack.c.b16 %v446, %v441
  %v667 = vpack.c.b16 %v447, %v442
  %v668 = vpack.c.b16 %v448, %v443
  %v669 = vpack.c.b16 %v449, %v444
  %v670 = vpack.c.b16 %v455, %v450
  %v671 = vpack.c.b16 %v456, %v451
  %v672 = vpack.c.b16 %v457, %v452
  %v673 = vpack.c.b16 %v458, %v453
  %v674 = vpack.c.b16 %v459, %v454
  %v675 = vpack.c.b16 %v465, %v460
  %v676 = vpack.c.b16 %v466, %v461
  %v677 = vpack.c.b16 %v467, %v462
  %v678 = vpack.c.b16 %v468, %v463
  %v679 = vpack.c.b16 %v469, %v464
  %v680 = vpack.c.b16 %v475, %v470
  %v681 = vpack.c.b16 %v476, %v471
  %v682 = vpack.c.b16 %v477, %v472
  %v683 = vpack.c.b16 %v478, %v473
  %v684 = vpack.c.b16 %v479, %v474
  %v685 = vpack.c.b16 %v485, %v480
  %v686 = vpack.c.b16 %v486, %v481
  %v687 = vpack.c.b16 %v487, %v482
  %v688 = vpack.c.b16 %v488, %v483
  %v689 = vpack.c.b16 %v489, %v484
  %v690 = vpack.c.b16 %v495, %v490
  %v691 = vpack.c.b16 %v496, %v491
  %v692 = vpack.c.b16 %v497, %v492
  %v693 = vpack.c.b16 %v498, %v493
  %v694 = vpack.c.b16 %v499, %v494
  %v695 = vpack.c.b16 %v505, %v500
  %v696 = vpack.c.b16 %v506, %v501
  %v697 = vpack.c.b16 %v507, %v502
  %v698 = vpack.c.b16 %v508, %v503
  %v699 = vpack.c.b16 %v509, %v504
  %v700 = vpack.c.b16 %v515, %v510
  %v701 = vpack.c.b16 %v516, %v511
  %v702 = vpack.c.b16 %v517, %v512
  %v703 = vpack.c.b16 %v518, %v513
  %v704 = vpack.c.b16 %v519, %v514
  %v705 = vpack.c.b16 %v525, %v520
  %v706 = vpack.c.b16 %v526, %v521
  %v707 = vpack.c.b16 %v527, %v522
  %v708 = vpack.c.b16 %v528, %v523
  %v709 = vpack.c.b16 %v529, %v524
  %v710 = vpack.c.b16 %v535, %v530
  %v711 = vpack.c.b16 %v536, %v531
  %v712 = vpack.c.b16 %v537, %v532
  %v713 = vpack.c.b16 %v538, %v533
  %v714 = vpack.c.b16 %v539, %v534
  %v715 = vpack.c.b16 %v545, %v540
  %v716 = vpack.c.b16 %v546, %v541
  %v717 = vpack.c.b16 %v547, %v542
  %v718 = vpack.c.b16 %v548, %v543
  %v719 = vpack.c.b16 %v549, %v544
  %v720 = vpack.c.b16 %v555, %v550
  %v721 = vpack.c.b16 %v556, %v551
  %v722 = vpack.c.b16 %v557, %v552
  %v723 = vpack.c.b16 %v558, %v553
  %v724 = vpack.c.b16 %v559, %v554
  %v725 = vpack.c.b16 %v565, %v560
  %v726 = vpack.c.b16 %v566, %v561
  %v727 = vpack.c.b16 %v567, %v562
  %v728 = vpack.c.b16 %v568, %v563
  %v729 = vpack.c.b16 %v569, %v564
  %v730 = vpack.c.b16 %v575, %v570
  %v731 = vpack.c.b16 %v576, %v571
  %v732 = vpack.c.b16 %v577, %v572
  %v733 = vpack.c.b16 %v578, %v573
  %v734 = vpack.c.b16 %v579, %v574
  %v735 = vpack.c.b16 %v585, %v580
  %v736 = vpack.c.b16 %v586, %v581
  %v737 = vpack.c.b16 %v587, %v582
  %v738 = vpack.c.b16 %v588, %v583
  %v739 = vpack.c.b16 %v589, %v584
  %v740 = vpack.c.b16 %v595, %v590
  %v741 = vpack.c.b16 %v596, %v591
  %v742 = vpack.c.b16 %v597, %v592
  %v743 = vpack.c.b16 %v598, %v593
  %v744 = vpack.c.b16 %v599, %v594
  %v745 = vpack.c.b16 %v605, %v600
  %v746 = vpack.c.b16 %v606, %v601
  %v747 = vpack.c.b16 %v607, %v602
  %v748 = vpack.c.b16 %v608, %v603
  %v749 = vpack.c.b16 %v609, %v604
  %v750 = vpack.c.b16 %v615, %v610
  %v751 = vpack.c.b16 %v616, %v611
  %v752 = vpack.c.b16 %v617, %v612
  %v753 = vpack.c.b16 %v618, %v613
  %v754 = vpack.c.b16 %v619, %v614
  %v755 = vpack.c.b16 %v625, %v620
  %v756 = vpack.c.b16 %v626, %v621
  %v757 = vpack.c.b16 %v627, %v622
  %v758 = vpack.c.b16 %v628, %v623
  %v759 = vpack.c.b16 %v629, %v624
  %v760 = vpack.c.b16 %v635, %v630
  %v761 = vpack.c.b16 %v636, %v631
  %v762 = vpack.c.b16 %v637, %v632
  %v763 = vpack.c.b16 %v638, %v633
  %v764 = vpack.c.b16 %v639, %v634
  %v765 = vpack.c.b16 %v645, %v640
  %v766 = vpack.c.b16 %v646, %v641
  %v767 = vpack.c.b16 %v647, %v642
  %v768 = vpack.c.b16 %v648, %v643
  %v769 = vpack.c.b16 %v649, %v644
  %890 = vmatprep.subr.bf16.mxu0 %v651
  %891 = vmatpush1.bf16.msra.mxu0 %v650
  %892 = vmatprep.subr.bf16.mxu0 %v656
  %893 = vmatpush1.bf16.msra.mxu0 %v655
  %894 = vmatprep.subr.bf16.mxu0 %v661
  %895 = vmatpush1.bf16.msra.mxu0 %v660
  %896 = vmatprep.subr.bf16.mxu0 %v666
  %897 = vmatpush1.bf16.msra.mxu0 %v665
  %898 = vmatprep.subr.bf16.mxu0 %v671
  %899 = vmatpush1.bf16.msra.mxu0 %v670
  %900 = vmatprep.subr.bf16.mxu0 %v676
  %901 = vmatpush1.bf16.msra.mxu0 %v675
  %902 = vmatprep.subr.bf16.mxu0 %v681
  %903 = vmatpush1.bf16.msra.mxu0 %v680
  %904 = vmatprep.subr.bf16.mxu0 %v686
  %905 = vmatpush1.bf16.msra.mxu0 %v685
  %906 = vmatprep.subr.bf16.mxu0 %v691
  %907 = vmatpush1.bf16.msra.mxu0 %v690
  %908 = vmatprep.subr.bf16.mxu0 %v696
  %909 = vmatpush1.bf16.msra.mxu0 %v695
  %910 = vmatprep.subr.bf16.mxu0 %v701
  %911 = vmatpush1.bf16.msra.mxu0 %v700
  %912 = vmatprep.subr.bf16.mxu0 %v706
  %913 = vmatpush1.bf16.msra.mxu0 %v705
  %914 = vmatprep.subr.bf16.mxu0 %v711
  %915 = vmatpush1.bf16.msra.mxu0 %v710
  %916 = vmatprep.subr.bf16.mxu0 %v716
  %917 = vmatpush1.bf16.msra.mxu0 %v715
  %918 = vmatprep.subr.bf16.mxu0 %v721
  %919 = vmatpush1.bf16.msra.mxu0 %v720
  %920 = vmatprep.subr.bf16.mxu0 %v726
  %921 = vmatpush1.bf16.msra.mxu0 %v725
  %922 = vmatprep.mubr.bf16.mxu0 %v232
  %923 = vmatmul.mubr.bf16.gmra.mrb[0].mxu0 %v231
  %v924 = vpop.f32.mrb[0].mxu0
  %v925 = vadd.f32 %v244, %v924
  %v926 = vpop.f32.mrb[0].mxu0
  %v927 = vadd.f32 %v248, %v926
  %v928 = vpop.f32.mrb[0].mxu0
  %v929 = vadd.f32 %v244, %v928
  %v930 = vpop.f32.mrb[0].mxu0
  %v931 = vadd.f32 %v248, %v930
  %932 = vmatprep.mubr.bf16.mxu0 %v235
  %933 = vmatmul.mubr.bf16.gmra.mrb[0].mxu0 %v234
  %v934 = vpop.f32.mrb[0].mxu0
  %v935 = vadd.f32 %v244, %v934
  %v936 = vpop.f32.mrb[0].mxu0
  %v937 = vadd.f32 %v248, %v936
  %v938 = vpop.f32.mrb[0].mxu0
  %v939 = vadd.f32 %v244, %v938
  %v940 = vpop.f32.mrb[0].mxu0
  %v941 = vadd.f32 %v248, %v940
  %942 = vmatprep.mubr.bf16.mxu0 %v238
  %943 = vmatmul.mubr.bf16.gmra.mrb[0].mxu0 %v237
  %v944 = vpop.f32.mrb[0].mxu0
  %v945 = vadd.f32 %v244, %v944
  %v946 = vpop.f32.mrb[0].mxu0
  %v947 = vadd.f32 %v248, %v946
  %v948 = vpop.f32.mrb[0].mxu0
  %v949 = vpop.f32.mrb[0].mxu0
  %950 = vdwg.mxu0
  %951 = vmatprep.subr.bf16.mxu0 %v731
  %952 = vmatpush1.bf16.msra.mxu0 %v730
  %953 = vmatprep.subr.bf16.mxu0 %v736
  %954 = vmatpush1.bf16.msra.mxu0 %v735
  %955 = vmatprep.subr.bf16.mxu0 %v741
  %956 = vmatpush1.bf16.msra.mxu0 %v740
  %957 = vmatprep.subr.bf16.mxu0 %v746
  %958 = vmatpush1.bf16.msra.mxu0 %v745
  %959 = vmatprep.subr.bf16.mxu0 %v751
  %960 = vmatpush1.bf16.msra.mxu0 %v750
  %961 = vmatprep.subr.bf16.mxu0 %v756
  %962 = vmatpush1.bf16.msra.mxu0 %v755
  %963 = vmatprep.subr.bf16.mxu0 %v761
  %964 = vmatpush1.bf16.msra.mxu0 %v760
  %965 = vmatprep.subr.bf16.mxu0 %v766
  %966 = vmatpush1.bf16.msra.mxu0 %v765
  %967 = vmatprep.subr.bf16.mxu0 0
  %968 = vmatpush1.bf16.msra.mxu0 0
  %969 = vmatprep.subr.bf16.mxu0 0
  %970 = vmatpush1.bf16.msra.mxu0 0
  %971 = vmatprep.subr.bf16.mxu0 0
  %972 = vmatpush1.bf16.msra.mxu0 0
  %973 = vmatprep.subr.bf16.mxu0 0
  %974 = vmatpush1.bf16.msra.mxu0 0
  %975 = vmatprep.subr.bf16.mxu0 0
  %976 = vmatpush1.bf16.msra.mxu0 0
  %977 = vmatprep.subr.bf16.mxu0 0
  %978 = vmatpush1.bf16.msra.mxu0 0
  %979 = vmatprep.subr.bf16.mxu0 0
  %980 = vmatpush1.bf16.msra.mxu0 0
  %981 = vmatprep.subr.bf16.mxu0 0
  %982 = vmatpush1.bf16.msra.mxu0 0
  %983 = vmatprep.mubr.bf16.mxu0 0
  %984 = vmatmul.mubr.bf16.gmra.mrb[0].mxu0 %v233
  %v985 = vpop.f32.mrb[0].mxu0
  %v986 = vadd.f32 %v925, %v985
  %v987 = vpop.f32.mrb[0].mxu0
  %v988 = vadd.f32 %v927, %v987
  %v989 = vpop.f32.mrb[0].mxu0
  %v990 = vadd.f32 %v929, %v989
  %v991 = vpop.f32.mrb[0].mxu0
  %v992 = vadd.f32 %v931, %v991
  %993 = vmatprep.mubr.bf16.mxu0 0
  %994 = vmatmul.mubr.bf16.gmra.mrb[0].mxu0 %v236
  %v995 = vpop.f32.mrb[0].mxu0
  %v996 = vadd.f32 %v935, %v995
  %v997 = vpop.f32.mrb[0].mxu0
  %v998 = vadd.f32 %v937, %v997
  %v999 = vpop.f32.mrb[0].mxu0
  %v1000 = vadd.f32 %v939, %v999
  %v1001 = vpop.f32.mrb[0].mxu0
  %v1002 = vadd.f32 %v941, %v1001
  %1003 = vmatprep.mubr.bf16.mxu0 0
  %1004 = vmatmul.mubr.bf16.gmra.mrb[0].mxu0 %v239
  %v1005 = vpop.f32.mrb[0].mxu0
  %v1006 = vadd.f32 %v945, %v1005
  %v1007 = vpop.f32.mrb[0].mxu0
  %v1008 = vadd.f32 %v947, %v1007
  %v1009 = vpop.f32.mrb[0].mxu0
  %v1010 = vpop.f32.mrb[0].mxu0
  %1011 = vdwg.mxu0
  %1012 = vmatprep.subr.bf16.mxu0 %v653
  %1013 = vmatpush1.bf16.msra.mxu0 %v652
  %1014 = vmatprep.subr.bf16.mxu0 %v658
  %1015 = vmatpush1.bf16.msra.mxu0 %v657
  %1016 = vmatprep.subr.bf16.mxu0 %v663
  %1017 = vmatpush1.bf16.msra.mxu0 %v662
  %1018 = vmatprep.subr.bf16.mxu0 %v668
  %1019 = vmatpush1.bf16.msra.mxu0 %v667
  %1020 = vmatprep.subr.bf16.mxu0 %v673
  %1021 = vmatpush1.bf16.msra.mxu0 %v672
  %1022 = vmatprep.subr.bf16.mxu0 %v678
  %1023 = vmatpush1.bf16.msra.mxu0 %v677
  %1024 = vmatprep.subr.bf16.mxu0 %v683
  %1025 = vmatpush1.bf16.msra.mxu0 %v682
  %1026 = vmatprep.subr.bf16.mxu0 %v688
  %1027 = vmatpush1.bf16.msra.mxu0 %v687
  %1028 = vmatprep.subr.bf16.mxu0 %v693
  %1029 = vmatpush1.bf16.msra.mxu0 %v692
  %1030 = vmatprep.subr.bf16.mxu0 %v698
  %1031 = vmatpush1.bf16.msra.mxu0 %v697
  %1032 = vmatprep.subr.bf16.mxu0 %v703
  %1033 = vmatpush1.bf16.msra.mxu0 %v702
  %1034 = vmatprep.subr.bf16.mxu0 %v708
  %1035 = vmatpush1.bf16.msra.mxu0 %v707
  %1036 = vmatprep.subr.bf16.mxu0 %v713
  %1037 = vmatpush1.bf16.msra.mxu0 %v712
  %1038 = vmatprep.subr.bf16.mxu0 %v718
  %1039 = vmatpush1.bf16.msra.mxu0 %v717
  %1040 = vmatprep.subr.bf16.mxu0 %v723
  %1041 = vmatpush1.bf16.msra.mxu0 %v722
  %1042 = vmatprep.subr.bf16.mxu0 %v728
  %1043 = vmatpush1.bf16.msra.mxu0 %v727
  %1044 = vmatprep.mubr.bf16.mxu0 %v232
  %1045 = vmatmul.mubr.bf16.gmra.mrb[0].mxu0 %v231
  %v1046 = vpop.f32.mrb[0].mxu0
  %v1047 = vadd.f32 %v252, %v1046
  %v1048 = vpop.f32.mrb[0].mxu0
  %v1049 = vadd.f32 %v256, %v1048
  %v1050 = vpop.f32.mrb[0].mxu0
  %v1051 = vadd.f32 %v252, %v1050
  %v1052 = vpop.f32.mrb[0].mxu0
  %v1053 = vadd.f32 %v256, %v1052
  %1054 = vmatprep.mubr.bf16.mxu0 %v235
  %1055 = vmatmul.mubr.bf16.gmra.mrb[0].mxu0 %v234
  %v1056 = vpop.f32.mrb[0].mxu0
  %v1057 = vadd.f32 %v252, %v1056
  %v1058 = vpop.f32.mrb[0].mxu0
  %v1059 = vadd.f32 %v256, %v1058
  %v1060 = vpop.f32.mrb[0].mxu0
  %v1061 = vadd.f32 %v252, %v1060
  %v1062 = vpop.f32.mrb[0].mxu0
  %v1063 = vadd.f32 %v256, %v1062
  %1064 = vmatprep.mubr.bf16.mxu0 %v238
  %1065 = vmatmul.mubr.bf16.gmra.mrb[0].mxu0 %v237
  %v1066 = vpop.f32.mrb[0].mxu0
  %v1067 = vadd.f32 %v252, %v1066
  %v1068 = vpop.f32.mrb[0].mxu0
  %v1069 = vadd.f32 %v256, %v1068
  %v1070 = vpop.f32.mrb[0].mxu0
  %v1071 = vpop.f32.mrb[0].mxu0
  %1072 = vdwg.mxu0
  %1073 = vmatprep.subr.bf16.mxu0 %v733
  %1074 = vmatpush1.bf16.msra.mxu0 %v732
  %1075 = vmatprep.subr.bf16.mxu0 %v738
  %1076 = vmatpush1.bf16.msra.mxu0 %v737
  %1077 = vmatprep.subr.bf16.mxu0 %v743
  %1078 = vmatpush1.bf16.msra.mxu0 %v742
  %1079 = vmatprep.subr.bf16.mxu0 %v748
  %1080 = vmatpush1.bf16.msra.mxu0 %v747
  %1081 = vmatprep.subr.bf16.mxu0 %v753
  %1082 = vmatpush1.bf16.msra.mxu0 %v752
  %1083 = vmatprep.subr.bf16.mxu0 %v758
  %1084 = vmatpush1.bf16.msra.mxu0 %v757
  %1085 = vmatprep.subr.bf16.mxu0 %v763
  %1086 = vmatpush1.bf16.msra.mxu0 %v762
  %1087 = vmatprep.subr.bf16.mxu0 %v768
  %1088 = vmatpush1.bf16.msra.mxu0 %v767
  %1089 = vmatprep.subr.bf16.mxu0 0
  %1090 = vmatpush1.bf16.msra.mxu0 0
  %1091 = vmatprep.subr.bf16.mxu0 0
  %1092 = vmatpush1.bf16.msra.mxu0 0
  %1093 = vmatprep.subr.bf16.mxu0 0
  %1094 = vmatpush1.bf16.msra.mxu0 0
  %1095 = vmatprep.subr.bf16.mxu0 0
  %1096 = vmatpush1.bf16.msra.mxu0 0
  %1097 = vmatprep.subr.bf16.mxu0 0
  %1098 = vmatpush1.bf16.msra.mxu0 0
  %1099 = vmatprep.subr.bf16.mxu0 0
  %1100 = vmatpush1.bf16.msra.mxu0 0
  %1101 = vmatprep.subr.bf16.mxu0 0
  %1102 = vmatpush1.bf16.msra.mxu0 0
  %1103 = vmatprep.subr.bf16.mxu0 0
  %1104 = vmatpush1.bf16.msra.mxu0 0
  %1105 = vmatprep.mubr.bf16.mxu0 0
  %1106 = vmatmul.mubr.bf16.gmra.mrb[0].mxu0 %v233
  %v1107 = vpop.f32.mrb[0].mxu0
  %v1108 = vadd.f32 %v1047, %v1107
  %v1109 = vpop.f32.mrb[0].mxu0
  %v1110 = vadd.f32 %v1049, %v1109
  %v1111 = vpop.f32.mrb[0].mxu0
  %v1112 = vadd.f32 %v1051, %v1111
  %v1113 = vpop.f32.mrb[0].mxu0
  %v1114 = vadd.f32 %v1053, %v1113
  %1115 = vmatprep.mubr.bf16.mxu0 0
  %1116 = vmatmul.mubr.bf16.gmra.mrb[0].mxu0 %v236
  %v1117 = vpop.f32.mrb[0].mxu0
  %v1118 = vadd.f32 %v1057, %v1117
  %v1119 = vpop.f32.mrb[0].mxu0
  %v1120 = vadd.f32 %v1059, %v1119
  %v1121 = vpop.f32.mrb[0].mxu0
  %v1122 = vadd.f32 %v1061, %v1121
  %v1123 = vpop.f32.mrb[0].mxu0
  %v1124 = vadd.f32 %v1063, %v1123
  %1125 = vmatprep.mubr.bf16.mxu0 0
  %1126 = vmatmul.mubr.bf16.gmra.mrb[0].mxu0 %v239
  %v1127 = vpop.f32.mrb[0].mxu0
  %v1128 = vadd.f32 %v1067, %v1127
  %v1129 = vpop.f32.mrb[0].mxu0
  %v1130 = vadd.f32 %v1069, %v1129
  %v1131 = vpop.f32.mrb[0].mxu0
  %v1132 = vpop.f32.mrb[0].mxu0
  %1133 = vdwg.mxu0
  %1134 = vmatprep.subr.bf16.mxu0 0
  %1135 = vmatpush1.bf16.msra.mxu0 %v654
  %1136 = vmatprep.subr.bf16.mxu0 0
  %1137 = vmatpush1.bf16.msra.mxu0 %v659
  %1138 = vmatprep.subr.bf16.mxu0 0
  %1139 = vmatpush1.bf16.msra.mxu0 %v664
  %1140 = vmatprep.subr.bf16.mxu0 0
  %1141 = vmatpush1.bf16.msra.mxu0 %v669
  %1142 = vmatprep.subr.bf16.mxu0 0
  %1143 = vmatpush1.bf16.msra.mxu0 %v674
  %1144 = vmatprep.subr.bf16.mxu0 0
  %1145 = vmatpush1.bf16.msra.mxu0 %v679
  %1146 = vmatprep.subr.bf16.mxu0 0
  %1147 = vmatpush1.bf16.msra.mxu0 %v684
  %1148 = vmatprep.subr.bf16.mxu0 0
  %1149 = vmatpush1.bf16.msra.mxu0 %v689
  %1150 = vmatprep.subr.bf16.mxu0 0
  %1151 = vmatpush1.bf16.msra.mxu0 %v694
  %1152 = vmatprep.subr.bf16.mxu0 0
  %1153 = vmatpush1.bf16.msra.mxu0 %v699
  %1154 = vmatprep.subr.bf16.mxu0 0
  %1155 = vmatpush1.bf16.msra.mxu0 %v704
  %1156 = vmatprep.subr.bf16.mxu0 0
  %1157 = vmatpush1.bf16.msra.mxu0 %v709
  %1158 = vmatprep.subr.bf16.mxu0 0
  %1159 = vmatpush1.bf16.msra.mxu0 %v714
  %1160 = vmatprep.subr.bf16.mxu0 0
  %1161 = vmatpush1.bf16.msra.mxu0 %v719
  %1162 = vmatprep.subr.bf16.mxu0 0
  %1163 = vmatpush1.bf16.msra.mxu0 %v724
  %1164 = vmatprep.subr.bf16.mxu0 0
  %1165 = vmatpush1.bf16.msra.mxu0 %v729
  %1166 = vmatprep.mubr.bf16.mxu0 %v232
  %1167 = vmatmul.mubr.bf16.gmra.mrb[0].mxu0 %v231
  %v1168 = vpop.f32.mrb[0].mxu0
  %v1169 = vadd.f32 %v260, %v1168
  %v1170 = vpop.f32.mrb[0].mxu0
  %v1171 = vpop.f32.mrb[0].mxu0
  %v1172 = vadd.f32 %v260, %v1171
  %v1173 = vpop.f32.mrb[0].mxu0
  %1174 = vmatprep.mubr.bf16.mxu0 %v235
  %1175 = vmatmul.mubr.bf16.gmra.mrb[0].mxu0 %v234
  %v1176 = vpop.f32.mrb[0].mxu0
  %v1177 = vadd.f32 %v260, %v1176
  %v1178 = vpop.f32.mrb[0].mxu0
  %v1179 = vpop.f32.mrb[0].mxu0
  %v1180 = vadd.f32 %v260, %v1179
  %v1181 = vpop.f32.mrb[0].mxu0
  %1182 = vmatprep.mubr.bf16.mxu0 %v238
  %1183 = vmatmul.mubr.bf16.gmra.mrb[0].mxu0 %v237
  %v1184 = vpop.f32.mrb[0].mxu0
  %v1185 = vadd.f32 %v260, %v1184
  %v1186 = vpop.f32.mrb[0].mxu0
  %v1187 = vpop.f32.mrb[0].mxu0
  %v1188 = vpop.f32.mrb[0].mxu0
  %1189 = vdwg.mxu0
  %1190 = vmatprep.subr.bf16.mxu0 0
  %1191 = vmatpush1.bf16.msra.mxu0 %v734
  %1192 = vmatprep.subr.bf16.mxu0 0
  %1193 = vmatpush1.bf16.msra.mxu0 %v739
  %1194 = vmatprep.subr.bf16.mxu0 0
  %1195 = vmatpush1.bf16.msra.mxu0 %v744
  %1196 = vmatprep.subr.bf16.mxu0 0
  %1197 = vmatpush1.bf16.msra.mxu0 %v749
  %1198 = vmatprep.subr.bf16.mxu0 0
  %1199 = vmatpush1.bf16.msra.mxu0 %v754
  %1200 = vmatprep.subr.bf16.mxu0 0
  %1201 = vmatpush1.bf16.msra.mxu0 %v759
  %1202 = vmatprep.subr.bf16.mxu0 0
  %1203 = vmatpush1.bf16.msra.mxu0 %v764
  %1204 = vmatprep.subr.bf16.mxu0 0
  %1205 = vmatpush1.bf16.msra.mxu0 %v769
  %1206 = vmatprep.subr.bf16.mxu0 0
  %1207 = vmatpush1.bf16.msra.mxu0 0
  %1208 = vmatprep.subr.bf16.mxu0 0
  %1209 = vmatpush1.bf16.msra.mxu0 0
  %1210 = vmatprep.subr.bf16.mxu0 0
  %1211 = vmatpush1.bf16.msra.mxu0 0
  %1212 = vmatprep.subr.bf16.mxu0 0
  %1213 = vmatpush1.bf16.msra.mxu0 0
  %1214 = vmatprep.subr.bf16.mxu0 0
  %1215 = vmatpush1.bf16.msra.mxu0 0
  %1216 = vmatprep.subr.bf16.mxu0 0
  %1217 = vmatpush1.bf16.msra.mxu0 0
  %1218 = vmatprep.subr.bf16.mxu0 0
  %1219 = vmatpush1.bf16.msra.mxu0 0
  %1220 = vmatprep.subr.bf16.mxu0 0
  %1221 = vmatpush1.bf16.msra.mxu0 0
  %1222 = vmatprep.mubr.bf16.mxu0 0
  %1223 = vmatmul.mubr.bf16.gmra.mrb[0].mxu0 %v233
  %v1224 = vpop.f32.mrb[0].mxu0
  %v1225 = vadd.f32 %v1169, %v1224
  %v1226 = vpop.f32.mrb[0].mxu0
  %v1227 = vpop.f32.mrb[0].mxu0
  %v1228 = vadd.f32 %v1172, %v1227
  %v1229 = vpop.f32.mrb[0].mxu0
  %1230 = vmatprep.mubr.bf16.mxu0 0
  %1231 = vmatmul.mubr.bf16.gmra.mrb[0].mxu0 %v236
  %v1232 = vpop.f32.mrb[0].mxu0
  %v1233 = vadd.f32 %v1177, %v1232
  %v1234 = vpop.f32.mrb[0].mxu0
  %v1235 = vpop.f32.mrb[0].mxu0
  %v1236 = vadd.f32 %v1180, %v1235
  %v1237 = vpop.f32.mrb[0].mxu0
  %1238 = vmatprep.mubr.bf16.mxu0 0
  %1239 = vmatmul.mubr.bf16.gmra.mrb[0].mxu0 %v239
  %v1240 = vpop.f32.mrb[0].mxu0
  %v1241 = vadd.f32 %v1185, %v1240
  %v1242 = vpop.f32.mrb[0].mxu0
  %v1243 = vpop.f32.mrb[0].mxu0
  %v1244 = vpop.f32.mrb[0].mxu0
  %1245 = vdwg.mxu0
  %v1246 = vld [vmem:[%s1] sm:$0xff]
  %v1247 = vld [vmem:[%s1 + $0x8] sm:$0xff]
  %v1248 = vld [vmem:[%s1 + $0x10] sm:$0xff]
  %v1249 = vld [vmem:[%s1 + $0x18] sm:$0xff]
  %v1250 = vld [vmem:[%s1 + $0x20] sm:$0xff]
  %v1251 = vld [vmem:[%s1 + $0x28] sm:$0xff]
  %v1252 = vld [vmem:[%s1 + $0x30] sm:$0xff]
  %v1253 = vld [vmem:[%s1 + $0x38] sm:$0xff]
  %v1254 = vld [vmem:[%s1 + $0x40] sm:$0xff]
  %v1255 = vld [vmem:[%s1 + $0x48] sm:$0xff]
  %v1256 = vld [vmem:[%s1 + $0x50] sm:$0xff]
  %v1257 = vld [vmem:[%s1 + $0x58] sm:$0xff]
  %v1258 = vld [vmem:[%s1 + $0x60] sm:$0xff]
  %v1259 = vld [vmem:[%s1 + $0x68] sm:$0xff]
  %v1260 = vld [vmem:[%s1 + $0x70] sm:$0xff]
  %v1261 = vld [vmem:[%s1 + $0x78] sm:$0xff]
  %v1262 = vld [vmem:[%s1 + $0x80] sm:$0x3]
  %v1263 = vld [vmem:[%s1 + $0x88] sm:$0x3]
  %v1264 = vld [vmem:[%s1 + $0x90] sm:$0x3]
  %v1265 = vld [vmem:[%s1 + $0x98] sm:$0x3]
  %v1266 = vmul.f32 %v988, %v1246
  %v1267 = vmul.f32 %v992, %v1250
  %v1268 = vmul.f32 %v998, %v1254
  %v1269 = vmul.f32 %v1002, %v1258
  %v1270 = vmul.f32 %v1008, %v1262
  %v1271 = vmul.f32 %v1108, %v1247
  %v1272 = vmul.f32 %v1112, %v1251
  %v1273 = vmul.f32 %v1118, %v1255
  %v1274 = vmul.f32 %v1122, %v1259
  %v1275 = vmul.f32 %v1128, %v1263
  %v1276 = vadd.f32 %v1266, %v1271
  %v1277 = vadd.f32 %v1267, %v1272
  %v1278 = vadd.f32 %v1268, %v1273
  %v1279 = vadd.f32 %v1269, %v1274
  %v1280 = vadd.f32 %v1270, %v1275
  %v1281 = vmul.f32 %v1110, %v1248
  %v1282 = vmul.f32 %v1114, %v1252
  %v1283 = vmul.f32 %v1120, %v1256
  %v1284 = vmul.f32 %v1124, %v1260
  %v1285 = vmul.f32 %v1130, %v1264
  %v1286 = vadd.f32 %v1276, %v1281
  %v1287 = vadd.f32 %v1277, %v1282
  %v1288 = vadd.f32 %v1278, %v1283
  %v1289 = vadd.f32 %v1279, %v1284
  %v1290 = vadd.f32 %v1280, %v1285
  %v1291 = vmul.f32 %v1225, %v1249
  %v1292 = vmul.f32 %v1228, %v1253
  %v1293 = vmul.f32 %v1233, %v1257
  %v1294 = vmul.f32 %v1236, %v1261
  %v1295 = vmul.f32 %v1241, %v1265
  %v1296 = vadd.f32 %v1286, %v1291
  %v1297 = vadd.f32 %v1287, %v1292
  %v1298 = vadd.f32 %v1288, %v1293
  %v1299 = vadd.f32 %v1289, %v1294
  %v1300 = vadd.f32 %v1290, %v1295
  %1301 = vst [vmem:[#allocation2 + $0x1] sm:$0xff] %v1296
  %1302 = vst [vmem:[#allocation2 + $0x9] sm:$0xff] %v1297
  %1303 = vst [vmem:[#allocation2 + $0x11] sm:$0xff] %v1298
  %1304 = vst [vmem:[#allocation2 + $0x19] sm:$0xff] %v1299
  %1305 = vst [vmem:[#allocation2 + $0x21] sm:$0x3] %v1300
  %v1306 = vld [vmem:[#allocation2] sm:$0xff]
  %v1307 = vld [vmem:[#allocation2 + $0x8] sm:$0xff]
  %v1308 = vld [vmem:[#allocation2 + $0x10] sm:$0xff]
  %v1309 = vld [vmem:[#allocation2 + $0x18] sm:$0xff]
  %v1310 = vld [vmem:[#allocation2 + $0x20] sm:$0x3]
  %v1311 = vld [vmem:[#allocation2 + $0x2] sm:$0xff]
  %v1312 = vld [vmem:[#allocation2 + $0xa] sm:$0xff]
  %v1313 = vld [vmem:[#allocation2 + $0x12] sm:$0xff]
  %v1314 = vld [vmem:[#allocation2 + $0x1a] sm:$0xff]
  %v1315 = vld [vmem:[#allocation2 + $0x22] sm:$0x3]
  %v1316 = vld [vmem:[%s5] sm:$0xf]
  %v1317 = vld [vmem:[%s5 + $0x4] sm:$0xf]
  %v1318 = vld [vmem:[%s5 + $0x8] sm:$0xf]
  %v1319 = vld [vmem:[%s5 + $0xc] sm:$0xf]
  %v1320 = vld [vmem:[%s5 + $0x10] sm:$0xf]
  %v1321 = vld [vmem:[%s5 + $0x14] sm:$0xf]
  %v1322 = vld [vmem:[%s5 + $0x18] sm:$0xf]
  %v1323 = vld [vmem:[%s5 + $0x1c] sm:$0xf]
  %v1324 = vld [vmem:[%s5 + $0x20] sm:$0xf]
  %v1325 = vld [vmem:[%s5 + $0x24] sm:$0xf]
  %v1326 = vld [vmem:[%s5 + $0x28] sm:$0xf]
  %v1327 = vld [vmem:[%s5 + $0x2c] sm:$0xf]
  %v1328 = vld [vmem:[%s5 + $0x30] sm:$0xf]
  %v1329 = vld [vmem:[%s5 + $0x34] sm:$0xf]
  %v1330 = vld [vmem:[%s5 + $0x38] sm:$0xf]
  %v1331 = vld [vmem:[%s5 + $0x3c] sm:$0xf]
  %v1332 = vld [vmem:[%s5 + $0x40] sm:$0xf]
  %v1333 = vld [vmem:[%s5 + $0x44] sm:$0xf]
  %v1334 = vld [vmem:[%s5 + $0x48] sm:$0xf]
  %v1335 = vld [vmem:[%s5 + $0x4c] sm:$0xf]
  %v1336 = vld [vmem:[%s5 + $0x50] sm:$0xf]
  %v1337 = vld [vmem:[%s5 + $0x54] sm:$0xf]
  %v1338 = vld [vmem:[%s5 + $0x58] sm:$0xf]
  %v1339 = vld [vmem:[%s5 + $0x5c] sm:$0xf]
  %v1340 = vld [vmem:[%s5 + $0x60] sm:$0xf]
  %v1341 = vld [vmem:[%s5 + $0x64] sm:$0xf]
  %v1342 = vld [vmem:[%s5 + $0x68] sm:$0xf]
  %v1343 = vld [vmem:[%s5 + $0x6c] sm:$0xf]
  %v1344 = vld [vmem:[%s5 + $0x70] sm:$0xf]
  %v1345 = vld [vmem:[%s5 + $0x74] sm:$0xf]
  %v1346 = vld [vmem:[%s5 + $0x78] sm:$0xf]
  %v1347 = vld [vmem:[%s5 + $0x7c] sm:$0xf]
  %v1348 = vld [vmem:[%s5 + $0x80] sm:$0xf]
  %v1349 = vld [vmem:[%s5 + $0x84] sm:$0xf]
  %v1350 = vld [vmem:[%s5 + $0x88] sm:$0xf]
  %v1351 = vld [vmem:[%s5 + $0x8c] sm:$0xf]
  %v1352 = vld [vmem:[%s5 + $0x90] sm:$0xf]
  %v1353 = vld [vmem:[%s5 + $0x94] sm:$0xf]
  %v1354 = vld [vmem:[%s5 + $0x98] sm:$0xf]
  %v1355 = vld [vmem:[%s5 + $0x9c] sm:$0xf]
  %v1356 = vld [vmem:[%s5 + $0xa0] sm:$0xf]
  %v1357 = vld [vmem:[%s5 + $0xa4] sm:$0xf]
  %v1358 = vld [vmem:[%s5 + $0xa8] sm:$0xf]
  %v1359 = vld [vmem:[%s5 + $0xac] sm:$0xf]
  %v1360 = vld [vmem:[%s5 + $0xb0] sm:$0xf]
  %v1361 = vld [vmem:[%s5 + $0xb4] sm:$0xf]
  %v1362 = vld [vmem:[%s5 + $0xb8] sm:$0xf]
  %v1363 = vld [vmem:[%s5 + $0xbc] sm:$0xf]
  %v1364 = vld [vmem:[%s6] sm:$0x1]
  %v1365 = vpack.c.bf16 %v1307, %v1306
  %v1366 = vpack.c.bf16 %v1297, %v1296
  %v1367 = vpack.c.bf16 %v1312, %v1311
  %v1368 = vpack.c.bf16 %v1309, %v1308
  %v1369 = vpack.c.bf16 %v1299, %v1298
  %v1370 = vpack.c.bf16 %v1314, %v1313
  %v1371 = vpack.c.bf16 %v1310, %v1310
  %v1372 = vpack.c.bf16 %v1300, %v1300
  %v1373 = vpack.c.bf16 %v1315, %v1315
  %v1374 = vlaneseq
  %v1375 = vshrl.u32 %v1374, 7
  %v1376 = vsub.s32 0, %v1375
  %v1377 = vrot.slane %v1364, %v1376
  %v1426 = vunpack.c.l.b16 %v1316
  %v1427 = vunpack.c.l.b16 %v1317
  %v1428 = vunpack.c.l.b16 %v1318
  %v1429 = vunpack.c.l.b16 %v1319
  %v1430 = vunpack.c.l.b16 %v1320
  %v1431 = vunpack.c.l.b16 %v1321
  %v1432 = vunpack.c.l.b16 %v1322
  %v1433 = vunpack.c.l.b16 %v1323
  %v1434 = vunpack.c.l.b16 %v1324
  %v1435 = vunpack.c.l.b16 %v1325
  %v1436 = vunpack.c.l.b16 %v1326
  %v1437 = vunpack.c.l.b16 %v1327
  %v1438 = vunpack.c.l.b16 %v1328
  %v1439 = vunpack.c.l.b16 %v1329
  %v1440 = vunpack.c.l.b16 %v1330
  %v1441 = vunpack.c.l.b16 %v1331
  %v1442 = vunpack.c.l.b16 %v1332
  %v1443 = vunpack.c.l.b16 %v1333
  %v1444 = vunpack.c.l.b16 %v1334
  %v1445 = vunpack.c.l.b16 %v1335
  %v1446 = vunpack.c.l.b16 %v1336
  %v1447 = vunpack.c.l.b16 %v1337
  %v1448 = vunpack.c.l.b16 %v1338
  %v1449 = vunpack.c.l.b16 %v1339
  %v1450 = vunpack.c.l.b16 %v1340
  %v1451 = vunpack.c.l.b16 %v1341
  %v1452 = vunpack.c.l.b16 %v1342
  %v1453 = vunpack.c.l.b16 %v1343
  %v1454 = vunpack.c.l.b16 %v1344
  %v1455 = vunpack.c.l.b16 %v1345
  %v1456 = vunpack.c.l.b16 %v1346
  %v1457 = vunpack.c.l.b16 %v1347
  %v1458 = vunpack.c.l.b16 %v1348
  %v1459 = vunpack.c.l.b16 %v1349
  %v1460 = vunpack.c.l.b16 %v1350
  %v1461 = vunpack.c.l.b16 %v1351
  %v1462 = vunpack.c.l.b16 %v1352
  %v1463 = vunpack.c.l.b16 %v1353
  %v1464 = vunpack.c.l.b16 %v1354
  %v1465 = vunpack.c.l.b16 %v1355
  %v1466 = vunpack.c.l.b16 %v1356
  %v1467 = vunpack.c.l.b16 %v1357
  %v1468 = vunpack.c.l.b16 %v1358
  %v1469 = vunpack.c.l.b16 %v1359
  %v1470 = vunpack.c.l.b16 %v1360
  %v1471 = vunpack.c.l.b16 %v1361
  %v1472 = vunpack.c.l.b16 %v1362
  %v1473 = vunpack.c.l.b16 %v1363
  %v1474 = vpack.c.b16 %v1427, %v1426
  %v1475 = vpack.c.b16 %v1429, %v1428
  %v1476 = vpack.c.b16 %v1431, %v1430
  %v1477 = vpack.c.b16 %v1433, %v1432
  %v1478 = vpack.c.b16 %v1435, %v1434
  %v1479 = vpack.c.b16 %v1437, %v1436
  %v1480 = vpack.c.b16 %v1439, %v1438
  %v1481 = vpack.c.b16 %v1441, %v1440
  %v1482 = vpack.c.b16 %v1443, %v1442
  %v1483 = vpack.c.b16 %v1445, %v1444
  %v1484 = vpack.c.b16 %v1447, %v1446
  %v1485 = vpack.c.b16 %v1449, %v1448
  %v1486 = vpack.c.b16 %v1451, %v1450
  %v1487 = vpack.c.b16 %v1453, %v1452
  %v1488 = vpack.c.b16 %v1455, %v1454
  %v1489 = vpack.c.b16 %v1457, %v1456
  %v1490 = vpack.c.b16 %v1459, %v1458
  %v1491 = vpack.c.b16 %v1461, %v1460
  %v1492 = vpack.c.b16 %v1463, %v1462
  %v1493 = vpack.c.b16 %v1465, %v1464
  %v1494 = vpack.c.b16 %v1467, %v1466
  %v1495 = vpack.c.b16 %v1469, %v1468
  %v1496 = vpack.c.b16 %v1471, %v1470
  %v1497 = vpack.c.b16 %v1473, %v1472
  %1522 = vmatprep.subr.bf16.mxu0 0
  %1523 = vmatpush1.bf16.msra.mxu0 %v1474
  %1524 = vmatprep.subr.bf16.mxu0 0
  %1525 = vmatpush1.bf16.msra.mxu0 %v1475
  %1526 = vmatprep.subr.bf16.mxu0 0
  %1527 = vmatpush1.bf16.msra.mxu0 %v1476
  %1528 = vmatprep.subr.bf16.mxu0 0
  %1529 = vmatpush1.bf16.msra.mxu0 %v1477
  %1530 = vmatprep.subr.bf16.mxu0 0
  %1531 = vmatpush1.bf16.msra.mxu0 %v1478
  %1532 = vmatprep.subr.bf16.mxu0 0
  %1533 = vmatpush1.bf16.msra.mxu0 %v1479
  %1534 = vmatprep.subr.bf16.mxu0 0
  %1535 = vmatpush1.bf16.msra.mxu0 %v1480
  %1536 = vmatprep.subr.bf16.mxu0 0
  %1537 = vmatpush1.bf16.msra.mxu0 %v1481
  %1538 = vmatprep.subr.bf16.mxu0 0
  %1539 = vmatpush1.bf16.msra.mxu0 %v1482
  %1540 = vmatprep.subr.bf16.mxu0 0
  %1541 = vmatpush1.bf16.msra.mxu0 %v1483
  %1542 = vmatprep.subr.bf16.mxu0 0
  %1543 = vmatpush1.bf16.msra.mxu0 %v1484
  %1544 = vmatprep.subr.bf16.mxu0 0
  %1545 = vmatpush1.bf16.msra.mxu0 %v1485
  %1546 = vmatprep.subr.bf16.mxu0 0
  %1547 = vmatpush1.bf16.msra.mxu0 %v1486
  %1548 = vmatprep.subr.bf16.mxu0 0
  %1549 = vmatpush1.bf16.msra.mxu0 %v1487
  %1550 = vmatprep.subr.bf16.mxu0 0
  %1551 = vmatpush1.bf16.msra.mxu0 %v1488
  %1552 = vmatprep.subr.bf16.mxu0 0
  %1553 = vmatpush1.bf16.msra.mxu0 %v1489
  %1554 = vmatprep.mubr.bf16.mxu0 %v1366
  %1555 = vmatmul.mubr.bf16.gmra.mrb[0].mxu0 %v1365
  %v1556 = vpop.f32.mrb[0].mxu0
  %v1557 = vadd.f32 %v1377, %v1556
  %v1558 = vpop.f32.mrb[0].mxu0
  %v1559 = vpop.f32.mrb[0].mxu0
  %v1560 = vadd.f32 %v1377, %v1559
  %v1561 = vpop.f32.mrb[0].mxu0
  %1562 = vmatprep.mubr.bf16.mxu0 %v1369
  %1563 = vmatmul.mubr.bf16.gmra.mrb[0].mxu0 %v1368
  %v1564 = vpop.f32.mrb[0].mxu0
  %v1565 = vadd.f32 %v1377, %v1564
  %v1566 = vpop.f32.mrb[0].mxu0
  %v1567 = vpop.f32.mrb[0].mxu0
  %v1568 = vadd.f32 %v1377, %v1567
  %v1569 = vpop.f32.mrb[0].mxu0
  %1570 = vmatprep.mubr.bf16.mxu0 %v1372
  %1571 = vmatmul.mubr.bf16.gmra.mrb[0].mxu0 %v1371
  %v1572 = vpop.f32.mrb[0].mxu0
  %v1573 = vadd.f32 %v1377, %v1572
  %v1574 = vpop.f32.mrb[0].mxu0
  %v1575 = vpop.f32.mrb[0].mxu0
  %v1576 = vpop.f32.mrb[0].mxu0
  %1577 = vdwg.mxu0
  %1578 = vmatprep.subr.bf16.mxu0 0
  %1579 = vmatpush1.bf16.msra.mxu0 %v1490
  %1580 = vmatprep.subr.bf16.mxu0 0
  %1581 = vmatpush1.bf16.msra.mxu0 %v1491
  %1582 = vmatprep.subr.bf16.mxu0 0
  %1583 = vmatpush1.bf16.msra.mxu0 %v1492
  %1584 = vmatprep.subr.bf16.mxu0 0
  %1585 = vmatpush1.bf16.msra.mxu0 %v1493
  %1586 = vmatprep.subr.bf16.mxu0 0
  %1587 = vmatpush1.bf16.msra.mxu0 %v1494
  %1588 = vmatprep.subr.bf16.mxu0 0
  %1589 = vmatpush1.bf16.msra.mxu0 %v1495
  %1590 = vmatprep.subr.bf16.mxu0 0
  %1591 = vmatpush1.bf16.msra.mxu0 %v1496
  %1592 = vmatprep.subr.bf16.mxu0 0
  %1593 = vmatpush1.bf16.msra.mxu0 %v1497
  %1594 = vmatprep.subr.bf16.mxu0 0
  %1595 = vmatpush1.bf16.msra.mxu0 0
  %1596 = vmatprep.subr.bf16.mxu0 0
  %1597 = vmatpush1.bf16.msra.mxu0 0
  %1598 = vmatprep.subr.bf16.mxu0 0
  %1599 = vmatpush1.bf16.msra.mxu0 0
  %1600 = vmatprep.subr.bf16.mxu0 0
  %1601 = vmatpush1.bf16.msra.mxu0 0
  %1602 = vmatprep.subr.bf16.mxu0 0
  %1603 = vmatpush1.bf16.msra.mxu0 0
  %1604 = vmatprep.subr.bf16.mxu0 0
  %1605 = vmatpush1.bf16.msra.mxu0 0
  %1606 = vmatprep.subr.bf16.mxu0 0
  %1607 = vmatpush1.bf16.msra.mxu0 0
  %1608 = vmatprep.subr.bf16.mxu0 0
  %1609 = vmatpush1.bf16.msra.mxu0 0
  %1610 = vmatprep.mubr.bf16.mxu0 0
  %1611 = vmatmul.mubr.bf16.gmra.mrb[0].mxu0 %v1367
  %v1612 = vpop.f32.mrb[0].mxu0
  %v1613 = vadd.f32 %v1557, %v1612
  %v1614 = vpop.f32.mrb[0].mxu0
  %v1615 = vpop.f32.mrb[0].mxu0
  %v1616 = vadd.f32 %v1560, %v1615
  %v1617 = vpop.f32.mrb[0].mxu0
  %1618 = vmatprep.mubr.bf16.mxu0 0
  %1619 = vmatmul.mubr.bf16.gmra.mrb[0].mxu0 %v1370
  %v1620 = vpop.f32.mrb[0].mxu0
  %v1621 = vadd.f32 %v1565, %v1620
  %v1622 = vpop.f32.mrb[0].mxu0
  %v1623 = vpop.f32.mrb[0].mxu0
  %v1624 = vadd.f32 %v1568, %v1623
  %v1625 = vpop.f32.mrb[0].mxu0
  %1626 = vmatprep.mubr.bf16.mxu0 0
  %1627 = vmatmul.mubr.bf16.gmra.mrb[0].mxu0 %v1373
  %v1628 = vpop.f32.mrb[0].mxu0
  %v1629 = vadd.f32 %v1573, %v1628
  %v1630 = vpop.f32.mrb[0].mxu0
  %v1631 = vpop.f32.mrb[0].mxu0
  %v1632 = vpop.f32.mrb[0].mxu0
  %1633 = vdwg.mxu0
  %v1634 = vmax.f32 %v1613, 0.0
  %v1635 = vmax.f32 %v1616, 0.0
  %v1636 = vmax.f32 %v1621, 0.0
  %v1637 = vmax.f32 %v1624, 0.0
  %v1638 = vmax.f32 %v1629, 0.0
  %v1639 = vmul.f32 %v1634, %v41
  %v1640 = vmul.f32 %v1635, %v42
  %v1641 = vmul.f32 %v1636, %v43
  %v1642 = vmul.f32 %v1637, %v44
  %v1643 = vmul.f32 %v1638, %v45
  %1644 = vst [vmem:[#allocation2 + $0x1] sm:$0xff] %v1639
  %1645 = vst [vmem:[#allocation2 + $0x9] sm:$0xff] %v1640
  %1646 = vst [vmem:[#allocation2 + $0x11] sm:$0xff] %v1641
  %1647 = vst [vmem:[#allocation2 + $0x19] sm:$0xff] %v1642
  %1648 = vst [vmem:[#allocation2 + $0x21] sm:$0x3] %v1643
  %v1649 = vld [vmem:[#allocation2] sm:$0xff]
  %v1650 = vld [vmem:[#allocation2 + $0x8] sm:$0xff]
  %v1651 = vld [vmem:[#allocation2 + $0x10] sm:$0xff]
  %v1652 = vld [vmem:[#allocation2 + $0x18] sm:$0xff]
  %v1653 = vld [vmem:[#allocation2 + $0x20] sm:$0x3]
  %v1654 = vld [vmem:[#allocation2 + $0x2] sm:$0xff]
  %v1655 = vld [vmem:[#allocation2 + $0xa] sm:$0xff]
  %v1656 = vld [vmem:[#allocation2 + $0x12] sm:$0xff]
  %v1657 = vld [vmem:[#allocation2 + $0x1a] sm:$0xff]
  %v1658 = vld [vmem:[#allocation2 + $0x22] sm:$0x3]
  %s1659 = scalar_lea.vmem %s5, 192
  %v1660 = vld [vmem:[%s1659] sm:$0xf]
  %v1661 = vld [vmem:[%s1659 + $0x4] sm:$0xf]
  %v1662 = vld [vmem:[%s1659 + $0x8] sm:$0xf]
  %v1663 = vld [vmem:[%s1659 + $0xc] sm:$0xf]
  %v1664 = vld [vmem:[%s1659 + $0x10] sm:$0xf]
  %v1665 = vld [vmem:[%s1659 + $0x14] sm:$0xf]
  %v1666 = vld [vmem:[%s1659 + $0x18] sm:$0xf]
  %v1667 = vld [vmem:[%s1659 + $0x1c] sm:$0xf]
  %v1668 = vld [vmem:[%s1659 + $0x20] sm:$0xf]
  %v1669 = vld [vmem:[%s1659 + $0x24] sm:$0xf]
  %v1670 = vld [vmem:[%s1659 + $0x28] sm:$0xf]
  %v1671 = vld [vmem:[%s1659 + $0x2c] sm:$0xf]
  %v1672 = vld [vmem:[%s1659 + $0x30] sm:$0xf]
  %v1673 = vld [vmem:[%s1659 + $0x34] sm:$0xf]
  %v1674 = vld [vmem:[%s1659 + $0x38] sm:$0xf]
  %v1675 = vld [vmem:[%s1659 + $0x3c] sm:$0xf]
  %v1676 = vld [vmem:[%s1659 + $0x40] sm:$0xf]
  %v1677 = vld [vmem:[%s1659 + $0x44] sm:$0xf]
  %v1678 = vld [vmem:[%s1659 + $0x48] sm:$0xf]
  %v1679 = vld [vmem:[%s1659 + $0x4c] sm:$0xf]
  %v1680 = vld [vmem:[%s1659 + $0x50] sm:$0xf]
  %v1681 = vld [vmem:[%s1659 + $0x54] sm:$0xf]
  %v1682 = vld [vmem:[%s1659 + $0x58] sm:$0xf]
  %v1683 = vld [vmem:[%s1659 + $0x5c] sm:$0xf]
  %v1684 = vld [vmem:[%s1659 + $0x60] sm:$0xf]
  %v1685 = vld [vmem:[%s1659 + $0x64] sm:$0xf]
  %v1686 = vld [vmem:[%s1659 + $0x68] sm:$0xf]
  %v1687 = vld [vmem:[%s1659 + $0x6c] sm:$0xf]
  %v1688 = vld [vmem:[%s1659 + $0x70] sm:$0xf]
  %v1689 = vld [vmem:[%s1659 + $0x74] sm:$0xf]
  %v1690 = vld [vmem:[%s1659 + $0x78] sm:$0xf]
  %v1691 = vld [vmem:[%s1659 + $0x7c] sm:$0xf]
  %v1692 = vld [vmem:[%s1659 + $0x80] sm:$0xf]
  %v1693 = vld [vmem:[%s1659 + $0x84] sm:$0xf]
  %v1694 = vld [vmem:[%s1659 + $0x88] sm:$0xf]
  %v1695 = vld [vmem:[%s1659 + $0x8c] sm:$0xf]
  %v1696 = vld [vmem:[%s1659 + $0x90] sm:$0xf]
  %v1697 = vld [vmem:[%s1659 + $0x94] sm:$0xf]
  %v1698 = vld [vmem:[%s1659 + $0x98] sm:$0xf]
  %v1699 = vld [vmem:[%s1659 + $0x9c] sm:$0xf]
  %v1700 = vld [vmem:[%s1659 + $0xa0] sm:$0xf]
  %v1701 = vld [vmem:[%s1659 + $0xa4] sm:$0xf]
  %v1702 = vld [vmem:[%s1659 + $0xa8] sm:$0xf]
  %v1703 = vld [vmem:[%s1659 + $0xac] sm:$0xf]
  %v1704 = vld [vmem:[%s1659 + $0xb0] sm:$0xf]
  %v1705 = vld [vmem:[%s1659 + $0xb4] sm:$0xf]
  %v1706 = vld [vmem:[%s1659 + $0xb8] sm:$0xf]
  %v1707 = vld [vmem:[%s1659 + $0xbc] sm:$0xf]
  %v1708 = vld [vmem:[%s6 + $0x1] sm:$0x1]
  %v1709 = vpack.c.bf16 %v1650, %v1649
  %v1710 = vpack.c.bf16 %v1640, %v1639
  %v1711 = vpack.c.bf16 %v1655, %v1654
  %v1712 = vpack.c.bf16 %v1652, %v1651
  %v1713 = vpack.c.bf16 %v1642, %v1641
  %v1714 = vpack.c.bf16 %v1657, %v1656
  %v1715 = vpack.c.bf16 %v1653, %v1653
  %v1716 = vpack.c.bf16 %v1643, %v1643
  %v1717 = vpack.c.bf16 %v1658, %v1658
  %v1718 = vlaneseq
  %v1719 = vshrl.u32 %v1718, 7
  %v1720 = vsub.s32 0, %v1719
  %v1721 = vrot.slane %v1708, %v1720
  %v1770 = vunpack.c.l.b16 %v1660
  %v1771 = vunpack.c.l.b16 %v1661
  %v1772 = vunpack.c.l.b16 %v1662
  %v1773 = vunpack.c.l.b16 %v1663
  %v1774 = vunpack.c.l.b16 %v1664
  %v1775 = vunpack.c.l.b16 %v1665
  %v1776 = vunpack.c.l.b16 %v1666
  %v1777 = vunpack.c.l.b16 %v1667
  %v1778 = vunpack.c.l.b16 %v1668
  %v1779 = vunpack.c.l.b16 %v1669
  %v1780 = vunpack.c.l.b16 %v1670
  %v1781 = vunpack.c.l.b16 %v1671
  %v1782 = vunpack.c.l.b16 %v1672
  %v1783 = vunpack.c.l.b16 %v1673
  %v1784 = vunpack.c.l.b16 %v1674
  %v1785 = vunpack.c.l.b16 %v1675
  %v1786 = vunpack.c.l.b16 %v1676
  %v1787 = vunpack.c.l.b16 %v1677
  %v1788 = vunpack.c.l.b16 %v1678
  %v1789 = vunpack.c.l.b16 %v1679
  %v1790 = vunpack.c.l.b16 %v1680
  %v1791 = vunpack.c.l.b16 %v1681
  %v1792 = vunpack.c.l.b16 %v1682
  %v1793 = vunpack.c.l.b16 %v1683
  %v1794 = vunpack.c.l.b16 %v1684
  %v1795 = vunpack.c.l.b16 %v1685
  %v1796 = vunpack.c.l.b16 %v1686
  %v1797 = vunpack.c.l.b16 %v1687
  %v1798 = vunpack.c.l.b16 %v1688
  %v1799 = vunpack.c.l.b16 %v1689
  %v1800 = vunpack.c.l.b16 %v1690
  %v1801 = vunpack.c.l.b16 %v1691
  %v1802 = vunpack.c.l.b16 %v1692
  %v1803 = vunpack.c.l.b16 %v1693
  %v1804 = vunpack.c.l.b16 %v1694
  %v1805 = vunpack.c.l.b16 %v1695
  %v1806 = vunpack.c.l.b16 %v1696
  %v1807 = vunpack.c.l.b16 %v1697
  %v1808 = vunpack.c.l.b16 %v1698
  %v1809 = vunpack.c.l.b16 %v1699
  %v1810 = vunpack.c.l.b16 %v1700
  %v1811 = vunpack.c.l.b16 %v1701
  %v1812 = vunpack.c.l.b16 %v1702
  %v1813 = vunpack.c.l.b16 %v1703
  %v1814 = vunpack.c.l.b16 %v1704
  %v1815 = vunpack.c.l.b16 %v1705
  %v1816 = vunpack.c.l.b16 %v1706
  %v1817 = vunpack.c.l.b16 %v1707
  %v1818 = vpack.c.b16 %v1771, %v1770
  %v1819 = vpack.c.b16 %v1773, %v1772
  %v1820 = vpack.c.b16 %v1775, %v1774
  %v1821 = vpack.c.b16 %v1777, %v1776
  %v1822 = vpack.c.b16 %v1779, %v1778
  %v1823 = vpack.c.b16 %v1781, %v1780
  %v1824 = vpack.c.b16 %v1783, %v1782
  %v1825 = vpack.c.b16 %v1785, %v1784
  %v1826 = vpack.c.b16 %v1787, %v1786
  %v1827 = vpack.c.b16 %v1789, %v1788
  %v1828 = vpack.c.b16 %v1791, %v1790
  %v1829 = vpack.c.b16 %v1793, %v1792
  %v1830 = vpack.c.b16 %v1795, %v1794
  %v1831 = vpack.c.b16 %v1797, %v1796
  %v1832 = vpack.c.b16 %v1799, %v1798
  %v1833 = vpack.c.b16 %v1801, %v1800
  %v1834 = vpack.c.b16 %v1803, %v1802
  %v1835 = vpack.c.b16 %v1805, %v1804
  %v1836 = vpack.c.b16 %v1807, %v1806
  %v1837 = vpack.c.b16 %v1809, %v1808
  %v1838 = vpack.c.b16 %v1811, %v1810
  %v1839 = vpack.c.b16 %v1813, %v1812
  %v1840 = vpack.c.b16 %v1815, %v1814
  %v1841 = vpack.c.b16 %v1817, %v1816
  %1866 = vmatprep.subr.bf16.mxu0 0
  %1867 = vmatpush1.bf16.msra.mxu0 %v1818
  %1868 = vmatprep.subr.bf16.mxu0 0
  %1869 = vmatpush1.bf16.msra.mxu0 %v1819
  %1870 = vmatprep.subr.bf16.mxu0 0
  %1871 = vmatpush1.bf16.msra.mxu0 %v1820
  %1872 = vmatprep.subr.bf16.mxu0 0
  %1873 = vmatpush1.bf16.msra.mxu0 %v1821
  %1874 = vmatprep.subr.bf16.mxu0 0
  %1875 = vmatpush1.bf16.msra.mxu0 %v1822
  %1876 = vmatprep.subr.bf16.mxu0 0
  %1877 = vmatpush1.bf16.msra.mxu0 %v1823
  %1878 = vmatprep.subr.bf16.mxu0 0
  %1879 = vmatpush1.bf16.msra.mxu0 %v1824
  %1880 = vmatprep.subr.bf16.mxu0 0
  %1881 = vmatpush1.bf16.msra.mxu0 %v1825
  %1882 = vmatprep.subr.bf16.mxu0 0
  %1883 = vmatpush1.bf16.msra.mxu0 %v1826
  %1884 = vmatprep.subr.bf16.mxu0 0
  %1885 = vmatpush1.bf16.msra.mxu0 %v1827
  %1886 = vmatprep.subr.bf16.mxu0 0
  %1887 = vmatpush1.bf16.msra.mxu0 %v1828
  %1888 = vmatprep.subr.bf16.mxu0 0
  %1889 = vmatpush1.bf16.msra.mxu0 %v1829
  %1890 = vmatprep.subr.bf16.mxu0 0
  %1891 = vmatpush1.bf16.msra.mxu0 %v1830
  %1892 = vmatprep.subr.bf16.mxu0 0
  %1893 = vmatpush1.bf16.msra.mxu0 %v1831
  %1894 = vmatprep.subr.bf16.mxu0 0
  %1895 = vmatpush1.bf16.msra.mxu0 %v1832
  %1896 = vmatprep.subr.bf16.mxu0 0
  %1897 = vmatpush1.bf16.msra.mxu0 %v1833
  %1898 = vmatprep.mubr.bf16.mxu0 %v1710
  %1899 = vmatmul.mubr.bf16.gmra.mrb[0].mxu0 %v1709
  %v1900 = vpop.f32.mrb[0].mxu0
  %v1901 = vadd.f32 %v1721, %v1900
  %v1902 = vpop.f32.mrb[0].mxu0
  %v1903 = vpop.f32.mrb[0].mxu0
  %v1904 = vadd.f32 %v1721, %v1903
  %v1905 = vpop.f32.mrb[0].mxu0
  %1906 = vmatprep.mubr.bf16.mxu0 %v1713
  %1907 = vmatmul.mubr.bf16.gmra.mrb[0].mxu0 %v1712
  %v1908 = vpop.f32.mrb[0].mxu0
  %v1909 = vadd.f32 %v1721, %v1908
  %v1910 = vpop.f32.mrb[0].mxu0
  %v1911 = vpop.f32.mrb[0].mxu0
  %v1912 = vadd.f32 %v1721, %v1911
  %v1913 = vpop.f32.mrb[0].mxu0
  %1914 = vmatprep.mubr.bf16.mxu0 %v1716
  %1915 = vmatmul.mubr.bf16.gmra.mrb[0].mxu0 %v1715
  %v1916 = vpop.f32.mrb[0].mxu0
  %v1917 = vadd.f32 %v1721, %v1916
  %v1918 = vpop.f32.mrb[0].mxu0
  %v1919 = vpop.f32.mrb[0].mxu0
  %v1920 = vpop.f32.mrb[0].mxu0
  %1921 = vdwg.mxu0
  %1922 = vmatprep.subr.bf16.mxu0 0
  %1923 = vmatpush1.bf16.msra.mxu0 %v1834
  %1924 = vmatprep.subr.bf16.mxu0 0
  %1925 = vmatpush1.bf16.msra.mxu0 %v1835
  %1926 = vmatprep.subr.bf16.mxu0 0
  %1927 = vmatpush1.bf16.msra.mxu0 %v1836
  %1928 = vmatprep.subr.bf16.mxu0 0
  %1929 = vmatpush1.bf16.msra.mxu0 %v1837
  %1930 = vmatprep.subr.bf16.mxu0 0
  %1931 = vmatpush1.bf16.msra.mxu0 %v1838
  %1932 = vmatprep.subr.bf16.mxu0 0
  %1933 = vmatpush1.bf16.msra.mxu0 %v1839
  %1934 = vmatprep.subr.bf16.mxu0 0
  %1935 = vmatpush1.bf16.msra.mxu0 %v1840
  %1936 = vmatprep.subr.bf16.mxu0 0
  %1937 = vmatpush1.bf16.msra.mxu0 %v1841
  %1938 = vmatprep.subr.bf16.mxu0 0
  %1939 = vmatpush1.bf16.msra.mxu0 0
  %1940 = vmatprep.subr.bf16.mxu0 0
  %1941 = vmatpush1.bf16.msra.mxu0 0
  %1942 = vmatprep.subr.bf16.mxu0 0
  %1943 = vmatpush1.bf16.msra.mxu0 0
  %1944 = vmatprep.subr.bf16.mxu0 0
  %1945 = vmatpush1.bf16.msra.mxu0 0
  %1946 = vmatprep.subr.bf16.mxu0 0
  %1947 = vmatpush1.bf16.msra.mxu0 0
  %1948 = vmatprep.subr.bf16.mxu0 0
  %1949 = vmatpush1.bf16.msra.mxu0 0
  %1950 = vmatprep.subr.bf16.mxu0 0
  %1951 = vmatpush1.bf16.msra.mxu0 0
  %1952 = vmatprep.subr.bf16.mxu0 0
  %1953 = vmatpush1.bf16.msra.mxu0 0
  %1954 = vmatprep.mubr.bf16.mxu0 0
  %1955 = vmatmul.mubr.bf16.gmra.mrb[0].mxu0 %v1711
  %v1956 = vpop.f32.mrb[0].mxu0
  %v1957 = vadd.f32 %v1901, %v1956
  %v1958 = vpop.f32.mrb[0].mxu0
  %v1959 = vpop.f32.mrb[0].mxu0
  %v1960 = vadd.f32 %v1904, %v1959
  %v1961 = vpop.f32.mrb[0].mxu0
  %1962 = vmatprep.mubr.bf16.mxu0 0
  %1963 = vmatmul.mubr.bf16.gmra.mrb[0].mxu0 %v1714
  %v1964 = vpop.f32.mrb[0].mxu0
  %v1965 = vadd.f32 %v1909, %v1964
  %v1966 = vpop.f32.mrb[0].mxu0
  %v1967 = vpop.f32.mrb[0].mxu0
  %v1968 = vadd.f32 %v1912, %v1967
  %v1969 = vpop.f32.mrb[0].mxu0
  %1970 = vmatprep.mubr.bf16.mxu0 0
  %1971 = vmatmul.mubr.bf16.gmra.mrb[0].mxu0 %v1717
  %v1972 = vpop.f32.mrb[0].mxu0
  %v1973 = vadd.f32 %v1917, %v1972
  %v1974 = vpop.f32.mrb[0].mxu0
  %v1975 = vpop.f32.mrb[0].mxu0
  %v1976 = vpop.f32.mrb[0].mxu0
  %1977 = vdwg.mxu0
  %v1978 = vmax.f32 %v1957, 0.0
  %v1979 = vmax.f32 %v1960, 0.0
  %v1980 = vmax.f32 %v1965, 0.0
  %v1981 = vmax.f32 %v1968, 0.0
  %v1982 = vmax.f32 %v1973, 0.0
  %v1983 = vmul.f32 %v1978, %v41
  %v1984 = vmul.f32 %v1979, %v42
  %v1985 = vmul.f32 %v1980, %v43
  %v1986 = vmul.f32 %v1981, %v44
  %v1987 = vmul.f32 %v1982, %v45
  %1988 = vst [vmem:[#allocation2 + $0x1] sm:$0xff] %v1983
  %1989 = vst [vmem:[#allocation2 + $0x9] sm:$0xff] %v1984
  %1990 = vst [vmem:[#allocation2 + $0x11] sm:$0xff] %v1985
  %1991 = vst [vmem:[#allocation2 + $0x19] sm:$0xff] %v1986
  %1992 = vst [vmem:[#allocation2 + $0x21] sm:$0x3] %v1987
  %v1993 = vld [vmem:[#allocation2] sm:$0xff]
  %v1994 = vld [vmem:[#allocation2 + $0x8] sm:$0xff]
  %v1995 = vld [vmem:[#allocation2 + $0x10] sm:$0xff]
  %v1996 = vld [vmem:[#allocation2 + $0x18] sm:$0xff]
  %v1997 = vld [vmem:[#allocation2 + $0x20] sm:$0x3]
  %v1998 = vld [vmem:[#allocation2 + $0x2] sm:$0xff]
  %v1999 = vld [vmem:[#allocation2 + $0xa] sm:$0xff]
  %v2000 = vld [vmem:[#allocation2 + $0x12] sm:$0xff]
  %v2001 = vld [vmem:[#allocation2 + $0x1a] sm:$0xff]
  %v2002 = vld [vmem:[#allocation2 + $0x22] sm:$0x3]
  %v2003 = vld [vmem:[%s7] sm:$0xf]
  %v2004 = vld [vmem:[%s7 + $0x4] sm:$0xf]
  %v2005 = vld [vmem:[%s7 + $0x8] sm:$0xf]
  %v2006 = vld [vmem:[%s7 + $0xc] sm:$0xf]
  %v2007 = vld [vmem:[%s7 + $0x10] sm:$0xf]
  %v2008 = vld [vmem:[%s7 + $0x14] sm:$0xf]
  %v2009 = vld [vmem:[%s7 + $0x18] sm:$0xf]
  %v2010 = vld [vmem:[%s7 + $0x1c] sm:$0xf]
  %v2011 = vld [vmem:[%s7 + $0x20] sm:$0xf]
  %v2012 = vld [vmem:[%s7 + $0x24] sm:$0xf]
  %v2013 = vld [vmem:[%s7 + $0x28] sm:$0xf]
  %v2014 = vld [vmem:[%s7 + $0x2c] sm:$0xf]
  %v2015 = vld [vmem:[%s7 + $0x30] sm:$0xf]
  %v2016 = vld [vmem:[%s7 + $0x34] sm:$0xf]
  %v2017 = vld [vmem:[%s7 + $0x38] sm:$0xf]
  %v2018 = vld [vmem:[%s7 + $0x3c] sm:$0xf]
  %v2019 = vld [vmem:[%s7 + $0x40] sm:$0xf]
  %v2020 = vld [vmem:[%s7 + $0x44] sm:$0xf]
  %v2021 = vld [vmem:[%s7 + $0x48] sm:$0xf]
  %v2022 = vld [vmem:[%s7 + $0x4c] sm:$0xf]
  %v2023 = vld [vmem:[%s7 + $0x50] sm:$0xf]
  %v2024 = vld [vmem:[%s7 + $0x54] sm:$0xf]
  %v2025 = vld [vmem:[%s7 + $0x58] sm:$0xf]
  %v2026 = vld [vmem:[%s7 + $0x5c] sm:$0xf]
  %v2027 = vld [vmem:[%s7 + $0x60] sm:$0xf]
  %v2028 = vld [vmem:[%s7 + $0x64] sm:$0xf]
  %v2029 = vld [vmem:[%s7 + $0x68] sm:$0xf]
  %v2030 = vld [vmem:[%s7 + $0x6c] sm:$0xf]
  %v2031 = vld [vmem:[%s7 + $0x70] sm:$0xf]
  %v2032 = vld [vmem:[%s7 + $0x74] sm:$0xf]
  %v2033 = vld [vmem:[%s7 + $0x78] sm:$0xf]
  %v2034 = vld [vmem:[%s7 + $0x7c] sm:$0xf]
  %v2035 = vld [vmem:[%s7 + $0x80] sm:$0xf]
  %v2036 = vld [vmem:[%s7 + $0x84] sm:$0xf]
  %v2037 = vld [vmem:[%s7 + $0x88] sm:$0xf]
  %v2038 = vld [vmem:[%s7 + $0x8c] sm:$0xf]
  %v2039 = vld [vmem:[%s7 + $0x90] sm:$0xf]
  %v2040 = vld [vmem:[%s7 + $0x94] sm:$0xf]
  %v2041 = vld [vmem:[%s7 + $0x98] sm:$0xf]
  %v2042 = vld [vmem:[%s7 + $0x9c] sm:$0xf]
  %v2043 = vld [vmem:[%s7 + $0xa0] sm:$0xf]
  %v2044 = vld [vmem:[%s7 + $0xa4] sm:$0xf]
  %v2045 = vld [vmem:[%s7 + $0xa8] sm:$0xf]
  %v2046 = vld [vmem:[%s7 + $0xac] sm:$0xf]
  %v2047 = vld [vmem:[%s7 + $0xb0] sm:$0xf]
  %v2048 = vld [vmem:[%s7 + $0xb4] sm:$0xf]
  %v2049 = vld [vmem:[%s7 + $0xb8] sm:$0xf]
  %v2050 = vld [vmem:[%s7 + $0xbc] sm:$0xf]
  %v2051 = vld [vmem:[%s8] sm:$0x1]
  %v2052 = vpack.c.bf16 %v1994, %v1993
  %v2053 = vpack.c.bf16 %v1984, %v1983
  %v2054 = vpack.c.bf16 %v1999, %v1998
  %v2055 = vpack.c.bf16 %v1996, %v1995
  %v2056 = vpack.c.bf16 %v1986, %v1985
  %v2057 = vpack.c.bf16 %v2001, %v2000
  %v2058 = vpack.c.bf16 %v1997, %v1997
  %v2059 = vpack.c.bf16 %v1987, %v1987
  %v2060 = vpack.c.bf16 %v2002, %v2002
  %v2062 = vlaneseq
  %v2063 = vshrl.u32 %v2062, 7
  %v2064 = vsub.s32 0, %v2063
  %v2065 = vrot.slane %v2051, %v2064
  %v2115 = vunpack.c.l.b16 %v2003
  %v2116 = vunpack.c.l.b16 %v2004
  %v2117 = vunpack.c.l.b16 %v2005
  %v2118 = vunpack.c.l.b16 %v2006
  %v2119 = vunpack.c.l.b16 %v2007
  %v2120 = vunpack.c.l.b16 %v2008
  %v2121 = vunpack.c.l.b16 %v2009
  %v2122 = vunpack.c.l.b16 %v2010
  %v2123 = vunpack.c.l.b16 %v2011
  %v2124 = vunpack.c.l.b16 %v2012
  %v2125 = vunpack.c.l.b16 %v2013
  %v2126 = vunpack.c.l.b16 %v2014
  %v2127 = vunpack.c.l.b16 %v2015
  %v2128 = vunpack.c.l.b16 %v2016
  %v2129 = vunpack.c.l.b16 %v2017
  %v2130 = vunpack.c.l.b16 %v2018
  %v2131 = vunpack.c.l.b16 %v2019
  %v2132 = vunpack.c.l.b16 %v2020
  %v2133 = vunpack.c.l.b16 %v2021
  %v2134 = vunpack.c.l.b16 %v2022
  %v2135 = vunpack.c.l.b16 %v2023
  %v2136 = vunpack.c.l.b16 %v2024
  %v2137 = vunpack.c.l.b16 %v2025
  %v2138 = vunpack.c.l.b16 %v2026
  %v2139 = vunpack.c.l.b16 %v2027
  %v2140 = vunpack.c.l.b16 %v2028
  %v2141 = vunpack.c.l.b16 %v2029
  %v2142 = vunpack.c.l.b16 %v2030
  %v2143 = vunpack.c.l.b16 %v2031
  %v2144 = vunpack.c.l.b16 %v2032
  %v2145 = vunpack.c.l.b16 %v2033
  %v2146 = vunpack.c.l.b16 %v2034
  %v2147 = vunpack.c.l.b16 %v2035
  %v2148 = vunpack.c.l.b16 %v2036
  %v2149 = vunpack.c.l.b16 %v2037
  %v2150 = vunpack.c.l.b16 %v2038
  %v2151 = vunpack.c.l.b16 %v2039
  %v2152 = vunpack.c.l.b16 %v2040
  %v2153 = vunpack.c.l.b16 %v2041
  %v2154 = vunpack.c.l.b16 %v2042
  %v2155 = vunpack.c.l.b16 %v2043
  %v2156 = vunpack.c.l.b16 %v2044
  %v2157 = vunpack.c.l.b16 %v2045
  %v2158 = vunpack.c.l.b16 %v2046
  %v2159 = vunpack.c.l.b16 %v2047
  %v2160 = vunpack.c.l.b16 %v2048
  %v2161 = vunpack.c.l.b16 %v2049
  %v2162 = vunpack.c.l.b16 %v2050
  %v2163 = vpack.c.b16 %v2116, %v2115
  %v2164 = vpack.c.b16 %v2118, %v2117
  %v2165 = vpack.c.b16 %v2120, %v2119
  %v2166 = vpack.c.b16 %v2122, %v2121
  %v2167 = vpack.c.b16 %v2124, %v2123
  %v2168 = vpack.c.b16 %v2126, %v2125
  %v2169 = vpack.c.b16 %v2128, %v2127
  %v2170 = vpack.c.b16 %v2130, %v2129
  %v2171 = vpack.c.b16 %v2132, %v2131
  %v2172 = vpack.c.b16 %v2134, %v2133
  %v2173 = vpack.c.b16 %v2136, %v2135
  %v2174 = vpack.c.b16 %v2138, %v2137
  %v2175 = vpack.c.b16 %v2140, %v2139
  %v2176 = vpack.c.b16 %v2142, %v2141
  %v2177 = vpack.c.b16 %v2144, %v2143
  %v2178 = vpack.c.b16 %v2146, %v2145
  %v2179 = vpack.c.b16 %v2148, %v2147
  %v2180 = vpack.c.b16 %v2150, %v2149
  %v2181 = vpack.c.b16 %v2152, %v2151
  %v2182 = vpack.c.b16 %v2154, %v2153
  %v2183 = vpack.c.b16 %v2156, %v2155
  %v2184 = vpack.c.b16 %v2158, %v2157
  %v2185 = vpack.c.b16 %v2160, %v2159
  %v2186 = vpack.c.b16 %v2162, %v2161
  %2211 = vmatprep.subr.bf16.mxu0 0
  %2212 = vmatpush1.bf16.msra.mxu0 %v2163
  %2213 = vmatprep.subr.bf16.mxu0 0
  %2214 = vmatpush1.bf16.msra.mxu0 %v2164
  %2215 = vmatprep.subr.bf16.mxu0 0
  %2216 = vmatpush1.bf16.msra.mxu0 %v2165
  %2217 = vmatprep.subr.bf16.mxu0 0
  %2218 = vmatpush1.bf16.msra.mxu0 %v2166
  %2219 = vmatprep.subr.bf16.mxu0 0
  %2220 = vmatpush1.bf16.msra.mxu0 %v2167
  %2221 = vmatprep.subr.bf16.mxu0 0
  %2222 = vmatpush1.bf16.msra.mxu0 %v2168
  %2223 = vmatprep.subr.bf16.mxu0 0
  %2224 = vmatpush1.bf16.msra.mxu0 %v2169
  %2225 = vmatprep.subr.bf16.mxu0 0
  %2226 = vmatpush1.bf16.msra.mxu0 %v2170
  %2227 = vmatprep.subr.bf16.mxu0 0
  %2228 = vmatpush1.bf16.msra.mxu0 %v2171
  %2229 = vmatprep.subr.bf16.mxu0 0
  %2230 = vmatpush1.bf16.msra.mxu0 %v2172
  %2231 = vmatprep.subr.bf16.mxu0 0
  %2232 = vmatpush1.bf16.msra.mxu0 %v2173
  %2233 = vmatprep.subr.bf16.mxu0 0
  %2234 = vmatpush1.bf16.msra.mxu0 %v2174
  %2235 = vmatprep.subr.bf16.mxu0 0
  %2236 = vmatpush1.bf16.msra.mxu0 %v2175
  %2237 = vmatprep.subr.bf16.mxu0 0
  %2238 = vmatpush1.bf16.msra.mxu0 %v2176
  %2239 = vmatprep.subr.bf16.mxu0 0
  %2240 = vmatpush1.bf16.msra.mxu0 %v2177
  %2241 = vmatprep.subr.bf16.mxu0 0
  %2242 = vmatpush1.bf16.msra.mxu0 %v2178
  %2243 = vmatprep.mubr.bf16.mxu0 %v2053
  %2244 = vmatmul.mubr.bf16.gmra.mrb[0].mxu0 %v2052
  %v2245 = vpop.f32.mrb[0].mxu0
  %v2246 = vadd.f32 %v2065, %v2245
  %v2247 = vpop.f32.mrb[0].mxu0
  %v2248 = vpop.f32.mrb[0].mxu0
  %v2249 = vadd.f32 %v2065, %v2248
  %v2250 = vpop.f32.mrb[0].mxu0
  %2251 = vmatprep.mubr.bf16.mxu0 %v2056
  %2252 = vmatmul.mubr.bf16.gmra.mrb[0].mxu0 %v2055
  %v2253 = vpop.f32.mrb[0].mxu0
  %v2254 = vadd.f32 %v2065, %v2253
  %v2255 = vpop.f32.mrb[0].mxu0
  %v2256 = vpop.f32.mrb[0].mxu0
  %v2257 = vadd.f32 %v2065, %v2256
  %v2258 = vpop.f32.mrb[0].mxu0
  %2259 = vmatprep.mubr.bf16.mxu0 %v2059
  %2260 = vmatmul.mubr.bf16.gmra.mrb[0].mxu0 %v2058
  %v2261 = vpop.f32.mrb[0].mxu0
  %v2262 = vadd.f32 %v2065, %v2261
  %v2263 = vpop.f32.mrb[0].mxu0
  %v2264 = vpop.f32.mrb[0].mxu0
  %v2265 = vpop.f32.mrb[0].mxu0
  %2266 = vdwg.mxu0
  %2267 = vmatprep.subr.bf16.mxu0 0
  %2268 = vmatpush1.bf16.msra.mxu0 %v2179
  %2269 = vmatprep.subr.bf16.mxu0 0
  %2270 = vmatpush1.bf16.msra.mxu0 %v2180
  %2271 = vmatprep.subr.bf16.mxu0 0
  %2272 = vmatpush1.bf16.msra.mxu0 %v2181
  %2273 = vmatprep.subr.bf16.mxu0 0
  %2274 = vmatpush1.bf16.msra.mxu0 %v2182
  %2275 = vmatprep.subr.bf16.mxu0 0
  %2276 = vmatpush1.bf16.msra.mxu0 %v2183
  %2277 = vmatprep.subr.bf16.mxu0 0
  %2278 = vmatpush1.bf16.msra.mxu0 %v2184
  %2279 = vmatprep.subr.bf16.mxu0 0
  %2280 = vmatpush1.bf16.msra.mxu0 %v2185
  %2281 = vmatprep.subr.bf16.mxu0 0
  %2282 = vmatpush1.bf16.msra.mxu0 %v2186
  %2283 = vmatprep.subr.bf16.mxu0 0
  %2284 = vmatpush1.bf16.msra.mxu0 0
  %2285 = vmatprep.subr.bf16.mxu0 0
  %2286 = vmatpush1.bf16.msra.mxu0 0
  %2287 = vmatprep.subr.bf16.mxu0 0
  %2288 = vmatpush1.bf16.msra.mxu0 0
  %2289 = vmatprep.subr.bf16.mxu0 0
  %2290 = vmatpush1.bf16.msra.mxu0 0
  %2291 = vmatprep.subr.bf16.mxu0 0
  %2292 = vmatpush1.bf16.msra.mxu0 0
  %2293 = vmatprep.subr.bf16.mxu0 0
  %2294 = vmatpush1.bf16.msra.mxu0 0
  %2295 = vmatprep.subr.bf16.mxu0 0
  %2296 = vmatpush1.bf16.msra.mxu0 0
  %2297 = vmatprep.subr.bf16.mxu0 0
  %2298 = vmatpush1.bf16.msra.mxu0 0
  %2299 = vmatprep.mubr.bf16.mxu0 0
  %2300 = vmatmul.mubr.bf16.gmra.mrb[0].mxu0 %v2054
  %v2301 = vpop.f32.mrb[0].mxu0
  %v2302 = vadd.f32 %v2246, %v2301
  %v2303 = vpop.f32.mrb[0].mxu0
  %v2304 = vpop.f32.mrb[0].mxu0
  %v2305 = vadd.f32 %v2249, %v2304
  %v2306 = vpop.f32.mrb[0].mxu0
  %2307 = vmatprep.mubr.bf16.mxu0 0
  %2308 = vmatmul.mubr.bf16.gmra.mrb[0].mxu0 %v2057
  %v2309 = vpop.f32.mrb[0].mxu0
  %v2310 = vadd.f32 %v2254, %v2309
  %v2311 = vpop.f32.mrb[0].mxu0
  %v2312 = vpop.f32.mrb[0].mxu0
  %v2313 = vadd.f32 %v2257, %v2312
  %v2314 = vpop.f32.mrb[0].mxu0
  %2315 = vmatprep.mubr.bf16.mxu0 0
  %2316 = vmatmul.mubr.bf16.gmra.mrb[0].mxu0 %v2060
  %v2317 = vpop.f32.mrb[0].mxu0
  %v2318 = vadd.f32 %v2262, %v2317
  %v2319 = vpop.f32.mrb[0].mxu0
  %v2320 = vpop.f32.mrb[0].mxu0
  %v2321 = vpop.f32.mrb[0].mxu0
  %2322 = vdwg.mxu0
  %v2323 = vadd.f32 %v986, %v2302
  %v2324 = vadd.f32 %v990, %v2305
  %v2325 = vadd.f32 %v996, %v2310
  %v2326 = vadd.f32 %v1000, %v2313
  %v2327 = vadd.f32 %v1006, %v2318
  %v2328 = vmul.f32 %v2323, %v41
  %v2329 = vmul.f32 %v2324, %v42
  %v2330 = vmul.f32 %v2325, %v43
  %v2331 = vmul.f32 %v2326, %v44
  %v2332 = vmul.f32 %v2327, %v45
  %2333 = vst [vmem:[#allocation2 + $0x1] sm:$0xff] %v2328
  %2334 = vst [vmem:[#allocation2 + $0x9] sm:$0xff] %v2329
  %2335 = vst [vmem:[#allocation2 + $0x11] sm:$0xff] %v2330
  %2336 = vst [vmem:[#allocation2 + $0x19] sm:$0xff] %v2331
  %2337 = vst [vmem:[#allocation2 + $0x21] sm:$0x3] %v2332
  %v2338 = vld [vmem:[#allocation2 + $0x2] sm:$0xff]
  %v2339 = vld [vmem:[#allocation2 + $0xa] sm:$0xff]
  %v2340 = vld [vmem:[#allocation2 + $0x12] sm:$0xff]
  %v2341 = vld [vmem:[#allocation2 + $0x1a] sm:$0xff]
  %v2342 = vld [vmem:[#allocation2 + $0x22] sm:$0x3]
  %v2343 = vld [vmem:[%s9] sm:$0xff]
  %v2344 = vld [vmem:[%s9 + $0x8] sm:$0xff]
  %v2345 = vld [vmem:[%s9 + $0x10] sm:$0xff]
  %v2346 = vld [vmem:[%s9 + $0x18] sm:$0xff]
  %v2347 = vld [vmem:[%s9 + $0x20] sm:$0xff]
  %v2348 = vld [vmem:[%s9 + $0x28] sm:$0xff]
  %v2349 = vld [vmem:[%s9 + $0x30] sm:$0xff]
  %v2350 = vld [vmem:[%s9 + $0x38] sm:$0xff]
  %v2351 = vld [vmem:[%s9 + $0x40] sm:$0xff]
  %v2352 = vld [vmem:[%s9 + $0x48] sm:$0xff]
  %v2353 = vld [vmem:[%s9 + $0x50] sm:$0xff]
  %v2354 = vld [vmem:[%s9 + $0x58] sm:$0xff]
  %v2355 = vld [vmem:[%s9 + $0x60] sm:$0xff]
  %v2356 = vld [vmem:[%s9 + $0x68] sm:$0xff]
  %v2357 = vld [vmem:[%s9 + $0x70] sm:$0xff]
  %v2358 = vld [vmem:[%s9 + $0x78] sm:$0xff]
  %v2359 = vld [vmem:[%s9 + $0x80] sm:$0xff]
  %v2360 = vld [vmem:[%s9 + $0x88] sm:$0xff]
  %v2361 = vld [vmem:[%s9 + $0x90] sm:$0xff]
  %v2362 = vld [vmem:[%s9 + $0x98] sm:$0xff]
  %v2363 = vld [vmem:[%s9 + $0xa0] sm:$0xff]
  %v2364 = vld [vmem:[%s9 + $0xa8] sm:$0xff]
  %v2365 = vld [vmem:[%s9 + $0xb0] sm:$0xff]
  %v2366 = vld [vmem:[%s9 + $0xb8] sm:$0xff]
  %v2367 = vld [vmem:[%s9 + $0xc0] sm:$0xff]
  %v2368 = vld [vmem:[%s9 + $0xc8] sm:$0xff]
  %v2369 = vld [vmem:[%s9 + $0xd0] sm:$0xff]
  %v2370 = vld [vmem:[%s9 + $0xd8] sm:$0xff]
  %v2371 = vld [vmem:[%s9 + $0xe0] sm:$0xff]
  %v2372 = vld [vmem:[%s9 + $0xe8] sm:$0xff]
  %v2373 = vld [vmem:[%s9 + $0xf0] sm:$0xff]
  %v2374 = vld [vmem:[%s9 + $0xf8] sm:$0xff]
  %v2375 = vld [vmem:[%s9 + $0x100] sm:$0xff]
  %v2376 = vld [vmem:[%s9 + $0x108] sm:$0xff]
  %v2377 = vld [vmem:[%s9 + $0x110] sm:$0xff]
  %v2378 = vld [vmem:[%s9 + $0x118] sm:$0xff]
  %v2379 = vld [vmem:[%s9 + $0x120] sm:$0xff]
  %v2380 = vld [vmem:[%s9 + $0x128] sm:$0xff]
  %v2381 = vld [vmem:[%s9 + $0x130] sm:$0xff]
  %v2382 = vld [vmem:[%s9 + $0x138] sm:$0xff]
  %v2383 = vld [vmem:[%s9 + $0x140] sm:$0xff]
  %v2384 = vld [vmem:[%s9 + $0x148] sm:$0xff]
  %v2385 = vld [vmem:[%s9 + $0x150] sm:$0xff]
  %v2386 = vld [vmem:[%s9 + $0x158] sm:$0xff]
  %v2387 = vld [vmem:[%s9 + $0x160] sm:$0xff]
  %v2388 = vld [vmem:[%s9 + $0x168] sm:$0xff]
  %v2389 = vld [vmem:[%s9 + $0x170] sm:$0xff]
  %v2390 = vld [vmem:[%s9 + $0x178] sm:$0xff]
  %v2391 = vld [vmem:[%s9 + $0x180] sm:$0xff]
  %v2392 = vld [vmem:[%s9 + $0x188] sm:$0xff]
  %v2393 = vld [vmem:[%s9 + $0x190] sm:$0xff]
  %v2394 = vld [vmem:[%s9 + $0x198] sm:$0xff]
  %v2395 = vld [vmem:[%s9 + $0x1a0] sm:$0xff]
  %v2396 = vld [vmem:[%s9 + $0x1a8] sm:$0xff]
  %v2397 = vld [vmem:[%s9 + $0x1b0] sm:$0xff]
  %v2398 = vld [vmem:[%s9 + $0x1b8] sm:$0xff]
  %v2399 = vld [vmem:[%s9 + $0x1c0] sm:$0xff]
  %v2400 = vld [vmem:[%s9 + $0x1c8] sm:$0xff]
  %v2401 = vld [vmem:[%s9 + $0x1d0] sm:$0xff]
  %v2402 = vld [vmem:[%s9 + $0x1d8] sm:$0xff]
  %v2403 = vld [vmem:[%s9 + $0x1e0] sm:$0xff]
  %v2404 = vld [vmem:[%s9 + $0x1e8] sm:$0xff]
  %v2405 = vld [vmem:[%s9 + $0x1f0] sm:$0xff]
  %v2406 = vld [vmem:[%s9 + $0x1f8] sm:$0xff]
  %v2407 = vld [vmem:[%s10] sm:$0xf]
  %v2408 = vpack.c.bf16 %v2329, %v2328
  %v2409 = vpack.c.bf16 %v2339, %v2338
  %v2410 = vpack.c.bf16 %v2331, %v2330
  %v2411 = vpack.c.bf16 %v2341, %v2340
  %v2412 = vpack.c.bf16 %v2332, %v2332
  %v2413 = vpack.c.bf16 %v2342, %v2342
  %v2415 = vlaneseq
  %v2416 = vshrl.u32 %v2415, 7
  %v2417 = vsub.s32 0, %v2416
  %v2418 = vrot.slane %v2407, %v2417
  %v2419 = vlaneseq
  %v2420 = vshrl.u32 %v2419, 7
  %v2421 = vsub.s32 1, %v2420
  %v2422 = vrot.slane %v2407, %v2421
  %v2423 = vlaneseq
  %v2424 = vshrl.u32 %v2423, 7
  %v2425 = vsub.s32 2, %v2424
  %v2426 = vrot.slane %v2407, %v2425
  %v2427 = vlaneseq
  %v2428 = vshrl.u32 %v2427, 7
  %v2429 = vsub.s32 3, %v2428
  %v2430 = vrot.slane %v2407, %v2429
  %v2499 = vunpack.c.l.b16 %v2343
  %v2500 = vunpack.c.h.b16 %v2343
  %v2501 = vunpack.c.l.b16 %v2344
  %v2502 = vunpack.c.h.b16 %v2344
  %v2503 = vunpack.c.l.b16 %v2345
  %v2504 = vunpack.c.h.b16 %v2345
  %v2505 = vunpack.c.l.b16 %v2346
  %v2506 = vunpack.c.h.b16 %v2346
  %v2507 = vunpack.c.l.b16 %v2347
  %v2508 = vunpack.c.h.b16 %v2347
  %v2509 = vunpack.c.l.b16 %v2348
  %v2510 = vunpack.c.h.b16 %v2348
  %v2511 = vunpack.c.l.b16 %v2349
  %v2512 = vunpack.c.h.b16 %v2349
  %v2513 = vunpack.c.l.b16 %v2350
  %v2514 = vunpack.c.h.b16 %v2350
  %v2515 = vunpack.c.l.b16 %v2351
  %v2516 = vunpack.c.h.b16 %v2351
  %v2517 = vunpack.c.l.b16 %v2352
  %v2518 = vunpack.c.h.b16 %v2352
  %v2519 = vunpack.c.l.b16 %v2353
  %v2520 = vunpack.c.h.b16 %v2353
  %v2521 = vunpack.c.l.b16 %v2354
  %v2522 = vunpack.c.h.b16 %v2354
  %v2523 = vunpack.c.l.b16 %v2355
  %v2524 = vunpack.c.h.b16 %v2355
  %v2525 = vunpack.c.l.b16 %v2356
  %v2526 = vunpack.c.h.b16 %v2356
  %v2527 = vunpack.c.l.b16 %v2357
  %v2528 = vunpack.c.h.b16 %v2357
  %v2529 = vunpack.c.l.b16 %v2358
  %v2530 = vunpack.c.h.b16 %v2358
  %v2531 = vunpack.c.l.b16 %v2359
  %v2532 = vunpack.c.h.b16 %v2359
  %v2533 = vunpack.c.l.b16 %v2360
  %v2534 = vunpack.c.h.b16 %v2360
  %v2535 = vunpack.c.l.b16 %v2361
  %v2536 = vunpack.c.h.b16 %v2361
  %v2537 = vunpack.c.l.b16 %v2362
  %v2538 = vunpack.c.h.b16 %v2362
  %v2539 = vunpack.c.l.b16 %v2363
  %v2540 = vunpack.c.h.b16 %v2363
  %v2541 = vunpack.c.l.b16 %v2364
  %v2542 = vunpack.c.h.b16 %v2364
  %v2543 = vunpack.c.l.b16 %v2365
  %v2544 = vunpack.c.h.b16 %v2365
  %v2545 = vunpack.c.l.b16 %v2366
  %v2546 = vunpack.c.h.b16 %v2366
  %v2547 = vunpack.c.l.b16 %v2367
  %v2548 = vunpack.c.h.b16 %v2367
  %v2549 = vunpack.c.l.b16 %v2368
  %v2550 = vunpack.c.h.b16 %v2368
  %v2551 = vunpack.c.l.b16 %v2369
  %v2552 = vunpack.c.h.b16 %v2369
  %v2553 = vunpack.c.l.b16 %v2370
  %v2554 = vunpack.c.h.b16 %v2370
  %v2555 = vunpack.c.l.b16 %v2371
  %v2556 = vunpack.c.h.b16 %v2371
  %v2557 = vunpack.c.l.b16 %v2372
  %v2558 = vunpack.c.h.b16 %v2372
  %v2559 = vunpack.c.l.b16 %v2373
  %v2560 = vunpack.c.h.b16 %v2373
  %v2561 = vunpack.c.l.b16 %v2374
  %v2562 = vunpack.c.h.b16 %v2374
  %v2563 = vunpack.c.l.b16 %v2375
  %v2564 = vunpack.c.h.b16 %v2375
  %v2565 = vunpack.c.l.b16 %v2376
  %v2566 = vunpack.c.h.b16 %v2376
  %v2567 = vunpack.c.l.b16 %v2377
  %v2568 = vunpack.c.h.b16 %v2377
  %v2569 = vunpack.c.l.b16 %v2378
  %v2570 = vunpack.c.h.b16 %v2378
  %v2571 = vunpack.c.l.b16 %v2379
  %v2572 = vunpack.c.h.b16 %v2379
  %v2573 = vunpack.c.l.b16 %v2380
  %v2574 = vunpack.c.h.b16 %v2380
  %v2575 = vunpack.c.l.b16 %v2381
  %v2576 = vunpack.c.h.b16 %v2381
  %v2577 = vunpack.c.l.b16 %v2382
  %v2578 = vunpack.c.h.b16 %v2382
  %v2579 = vunpack.c.l.b16 %v2383
  %v2580 = vunpack.c.h.b16 %v2383
  %v2581 = vunpack.c.l.b16 %v2384
  %v2582 = vunpack.c.h.b16 %v2384
  %v2583 = vunpack.c.l.b16 %v2385
  %v2584 = vunpack.c.h.b16 %v2385
  %v2585 = vunpack.c.l.b16 %v2386
  %v2586 = vunpack.c.h.b16 %v2386
  %v2587 = vunpack.c.l.b16 %v2387
  %v2588 = vunpack.c.h.b16 %v2387
  %v2589 = vunpack.c.l.b16 %v2388
  %v2590 = vunpack.c.h.b16 %v2388
  %v2591 = vunpack.c.l.b16 %v2389
  %v2592 = vunpack.c.h.b16 %v2389
  %v2593 = vunpack.c.l.b16 %v2390
  %v2594 = vunpack.c.h.b16 %v2390
  %v2595 = vunpack.c.l.b16 %v2391
  %v2596 = vunpack.c.h.b16 %v2391
  %v2597 = vunpack.c.l.b16 %v2392
  %v2598 = vunpack.c.h.b16 %v2392
  %v2599 = vunpack.c.l.b16 %v2393
  %v2600 = vunpack.c.h.b16 %v2393
  %v2601 = vunpack.c.l.b16 %v2394
  %v2602 = vunpack.c.h.b16 %v2394
  %v2603 = vunpack.c.l.b16 %v2395
  %v2604 = vunpack.c.h.b16 %v2395
  %v2605 = vunpack.c.l.b16 %v2396
  %v2606 = vunpack.c.h.b16 %v2396
  %v2607 = vunpack.c.l.b16 %v2397
  %v2608 = vunpack.c.h.b16 %v2397
  %v2609 = vunpack.c.l.b16 %v2398
  %v2610 = vunpack.c.h.b16 %v2398
  %v2611 = vunpack.c.l.b16 %v2399
  %v2612 = vunpack.c.h.b16 %v2399
  %v2613 = vunpack.c.l.b16 %v2400
  %v2614 = vunpack.c.h.b16 %v2400
  %v2615 = vunpack.c.l.b16 %v2401
  %v2616 = vunpack.c.h.b16 %v2401
  %v2617 = vunpack.c.l.b16 %v2402
  %v2618 = vunpack.c.h.b16 %v2402
  %v2619 = vunpack.c.l.b16 %v2403
  %v2620 = vunpack.c.h.b16 %v2403
  %v2621 = vunpack.c.l.b16 %v2404
  %v2622 = vunpack.c.h.b16 %v2404
  %v2623 = vunpack.c.l.b16 %v2405
  %v2624 = vunpack.c.h.b16 %v2405
  %v2625 = vunpack.c.l.b16 %v2406
  %v2626 = vunpack.c.h.b16 %v2406
  %v2627 = vpack.c.b16 %v2503, %v2499
  %v2628 = vpack.c.b16 %v2504, %v2500
  %v2629 = vpack.c.b16 %v2505, %v2501
  %v2630 = vpack.c.b16 %v2506, %v2502
  %v2631 = vpack.c.b16 %v2511, %v2507
  %v2632 = vpack.c.b16 %v2512, %v2508
  %v2633 = vpack.c.b16 %v2513, %v2509
  %v2634 = vpack.c.b16 %v2514, %v2510
  %v2635 = vpack.c.b16 %v2519, %v2515
  %v2636 = vpack.c.b16 %v2520, %v2516
  %v2637 = vpack.c.b16 %v2521, %v2517
  %v2638 = vpack.c.b16 %v2522, %v2518
  %v2639 = vpack.c.b16 %v2527, %v2523
  %v2640 = vpack.c.b16 %v2528, %v2524
  %v2641 = vpack.c.b16 %v2529, %v2525
  %v2642 = vpack.c.b16 %v2530, %v2526
  %v2643 = vpack.c.b16 %v2535, %v2531
  %v2644 = vpack.c.b16 %v2536, %v2532
  %v2645 = vpack.c.b16 %v2537, %v2533
  %v2646 = vpack.c.b16 %v2538, %v2534
  %v2647 = vpack.c.b16 %v2543, %v2539
  %v2648 = vpack.c.b16 %v2544, %v2540
  %v2649 = vpack.c.b16 %v2545, %v2541
  %v2650 = vpack.c.b16 %v2546, %v2542
  %v2651 = vpack.c.b16 %v2551, %v2547
  %v2652 = vpack.c.b16 %v2552, %v2548
  %v2653 = vpack.c.b16 %v2553, %v2549
  %v2654 = vpack.c.b16 %v2554, %v2550
  %v2655 = vpack.c.b16 %v2559, %v2555
  %v2656 = vpack.c.b16 %v2560, %v2556
  %v2657 = vpack.c.b16 %v2561, %v2557
  %v2658 = vpack.c.b16 %v2562, %v2558
  %v2659 = vpack.c.b16 %v2567, %v2563
  %v2660 = vpack.c.b16 %v2568, %v2564
  %v2661 = vpack.c.b16 %v2569, %v2565
  %v2662 = vpack.c.b16 %v2570, %v2566
  %v2663 = vpack.c.b16 %v2575, %v2571
  %v2664 = vpack.c.b16 %v2576, %v2572
  %v2665 = vpack.c.b16 %v2577, %v2573
  %v2666 = vpack.c.b16 %v2578, %v2574
  %v2667 = vpack.c.b16 %v2583, %v2579
  %v2668 = vpack.c.b16 %v2584, %v2580
  %v2669 = vpack.c.b16 %v2585, %v2581
  %v2670 = vpack.c.b16 %v2586, %v2582
  %v2671 = vpack.c.b16 %v2591, %v2587
  %v2672 = vpack.c.b16 %v2592, %v2588
  %v2673 = vpack.c.b16 %v2593, %v2589
  %v2674 = vpack.c.b16 %v2594, %v2590
  %v2675 = vpack.c.b16 %v2599, %v2595
  %v2676 = vpack.c.b16 %v2600, %v2596
  %v2677 = vpack.c.b16 %v2601, %v2597
  %v2678 = vpack.c.b16 %v2602, %v2598
  %v2679 = vpack.c.b16 %v2607, %v2603
  %v2680 = vpack.c.b16 %v2608, %v2604
  %v2681 = vpack.c.b16 %v2609, %v2605
  %v2682 = vpack.c.b16 %v2610, %v2606
  %v2683 = vpack.c.b16 %v2615, %v2611
  %v2684 = vpack.c.b16 %v2616, %v2612
  %v2685 = vpack.c.b16 %v2617, %v2613
  %v2686 = vpack.c.b16 %v2618, %v2614
  %v2687 = vpack.c.b16 %v2623, %v2619
  %v2688 = vpack.c.b16 %v2624, %v2620
  %v2689 = vpack.c.b16 %v2625, %v2621
  %v2690 = vpack.c.b16 %v2626, %v2622
  %2755 = vmatprep.subr.bf16.mxu0 %v2628
  %2756 = vmatpush1.bf16.msra.mxu0 %v2627
  %2757 = vmatprep.subr.bf16.mxu0 %v2632
  %2758 = vmatpush1.bf16.msra.mxu0 %v2631
  %2759 = vmatprep.subr.bf16.mxu0 %v2636
  %2760 = vmatpush1.bf16.msra.mxu0 %v2635
  %2761 = vmatprep.subr.bf16.mxu0 %v2640
  %2762 = vmatpush1.bf16.msra.mxu0 %v2639
  %2763 = vmatprep.subr.bf16.mxu0 %v2644
  %2764 = vmatpush1.bf16.msra.mxu0 %v2643
  %2765 = vmatprep.subr.bf16.mxu0 %v2648
  %2766 = vmatpush1.bf16.msra.mxu0 %v2647
  %2767 = vmatprep.subr.bf16.mxu0 %v2652
  %2768 = vmatpush1.bf16.msra.mxu0 %v2651
  %2769 = vmatprep.subr.bf16.mxu0 %v2656
  %2770 = vmatpush1.bf16.msra.mxu0 %v2655
  %2771 = vmatprep.subr.bf16.mxu0 %v2660
  %2772 = vmatpush1.bf16.msra.mxu0 %v2659
  %2773 = vmatprep.subr.bf16.mxu0 %v2664
  %2774 = vmatpush1.bf16.msra.mxu0 %v2663
  %2775 = vmatprep.subr.bf16.mxu0 %v2668
  %2776 = vmatpush1.bf16.msra.mxu0 %v2667
  %2777 = vmatprep.subr.bf16.mxu0 %v2672
  %2778 = vmatpush1.bf16.msra.mxu0 %v2671
  %2779 = vmatprep.subr.bf16.mxu0 %v2676
  %2780 = vmatpush1.bf16.msra.mxu0 %v2675
  %2781 = vmatprep.subr.bf16.mxu0 %v2680
  %2782 = vmatpush1.bf16.msra.mxu0 %v2679
  %2783 = vmatprep.subr.bf16.mxu0 %v2684
  %2784 = vmatpush1.bf16.msra.mxu0 %v2683
  %2785 = vmatprep.subr.bf16.mxu0 %v2688
  %2786 = vmatpush1.bf16.msra.mxu0 %v2687
  %2787 = vmatprep.mubr.bf16.mxu0 %v2409
  %2788 = vmatmul.mubr.bf16.gmra.mrb[0].mxu0 %v2408
  %v2789 = vpop.f32.mrb[0].mxu0
  %v2790 = vadd.f32 %v2418, %v2789
  %v2791 = vpop.f32.mrb[0].mxu0
  %v2792 = vadd.f32 %v2422, %v2791
  %v2793 = vpop.f32.mrb[0].mxu0
  %v2794 = vadd.f32 %v2418, %v2793
  %v2795 = vpop.f32.mrb[0].mxu0
  %v2796 = vadd.f32 %v2422, %v2795
  %2797 = vmatprep.mubr.bf16.mxu0 %v2411
  %2798 = vmatmul.mubr.bf16.gmra.mrb[0].mxu0 %v2410
  %v2799 = vpop.f32.mrb[0].mxu0
  %v2800 = vadd.f32 %v2418, %v2799
  %v2801 = vpop.f32.mrb[0].mxu0
  %v2802 = vadd.f32 %v2422, %v2801
  %v2803 = vpop.f32.mrb[0].mxu0
  %v2804 = vadd.f32 %v2418, %v2803
  %v2805 = vpop.f32.mrb[0].mxu0
  %v2806 = vadd.f32 %v2422, %v2805
  %2807 = vmatprep.mubr.bf16.mxu0 %v2413
  %2808 = vmatmul.mubr.bf16.gmra.mrb[0].mxu0 %v2412
  %v2809 = vpop.f32.mrb[0].mxu0
  %v2810 = vadd.f32 %v2418, %v2809
  %v2811 = vpop.f32.mrb[0].mxu0
  %v2812 = vadd.f32 %v2422, %v2811
  %v2813 = vpop.f32.mrb[0].mxu0
  %v2814 = vpop.f32.mrb[0].mxu0
  %2815 = vdwg.mxu0
  %2816 = vmatprep.subr.bf16.mxu0 %v2630
  %2817 = vmatpush1.bf16.msra.mxu0 %v2629
  %2818 = vmatprep.subr.bf16.mxu0 %v2634
  %2819 = vmatpush1.bf16.msra.mxu0 %v2633
  %2820 = vmatprep.subr.bf16.mxu0 %v2638
  %2821 = vmatpush1.bf16.msra.mxu0 %v2637
  %2822 = vmatprep.subr.bf16.mxu0 %v2642
  %2823 = vmatpush1.bf16.msra.mxu0 %v2641
  %2824 = vmatprep.subr.bf16.mxu0 %v2646
  %2825 = vmatpush1.bf16.msra.mxu0 %v2645
  %2826 = vmatprep.subr.bf16.mxu0 %v2650
  %2827 = vmatpush1.bf16.msra.mxu0 %v2649
  %2828 = vmatprep.subr.bf16.mxu0 %v2654
  %2829 = vmatpush1.bf16.msra.mxu0 %v2653
  %2830 = vmatprep.subr.bf16.mxu0 %v2658
  %2831 = vmatpush1.bf16.msra.mxu0 %v2657
  %2832 = vmatprep.subr.bf16.mxu0 %v2662
  %2833 = vmatpush1.bf16.msra.mxu0 %v2661
  %2834 = vmatprep.subr.bf16.mxu0 %v2666
  %2835 = vmatpush1.bf16.msra.mxu0 %v2665
  %2836 = vmatprep.subr.bf16.mxu0 %v2670
  %2837 = vmatpush1.bf16.msra.mxu0 %v2669
  %2838 = vmatprep.subr.bf16.mxu0 %v2674
  %2839 = vmatpush1.bf16.msra.mxu0 %v2673
  %2840 = vmatprep.subr.bf16.mxu0 %v2678
  %2841 = vmatpush1.bf16.msra.mxu0 %v2677
  %2842 = vmatprep.subr.bf16.mxu0 %v2682
  %2843 = vmatpush1.bf16.msra.mxu0 %v2681
  %2844 = vmatprep.subr.bf16.mxu0 %v2686
  %2845 = vmatpush1.bf16.msra.mxu0 %v2685
  %2846 = vmatprep.subr.bf16.mxu0 %v2690
  %2847 = vmatpush1.bf16.msra.mxu0 %v2689
  %2848 = vmatprep.mubr.bf16.mxu0 %v2409
  %2849 = vmatmul.mubr.bf16.gmra.mrb[0].mxu0 %v2408
  %v2850 = vpop.f32.mrb[0].mxu0
  %v2851 = vadd.f32 %v2426, %v2850
  %v2852 = vpop.f32.mrb[0].mxu0
  %v2853 = vadd.f32 %v2430, %v2852
  %v2854 = vpop.f32.mrb[0].mxu0
  %v2855 = vadd.f32 %v2426, %v2854
  %v2856 = vpop.f32.mrb[0].mxu0
  %v2857 = vadd.f32 %v2430, %v2856
  %2858 = vmatprep.mubr.bf16.mxu0 %v2411
  %2859 = vmatmul.mubr.bf16.gmra.mrb[0].mxu0 %v2410
  %v2860 = vpop.f32.mrb[0].mxu0
  %v2861 = vadd.f32 %v2426, %v2860
  %v2862 = vpop.f32.mrb[0].mxu0
  %v2863 = vadd.f32 %v2430, %v2862
  %v2864 = vpop.f32.mrb[0].mxu0
  %v2865 = vadd.f32 %v2426, %v2864
  %v2866 = vpop.f32.mrb[0].mxu0
  %v2867 = vadd.f32 %v2430, %v2866
  %2868 = vmatprep.mubr.bf16.mxu0 %v2413
  %2869 = vmatmul.mubr.bf16.gmra.mrb[0].mxu0 %v2412
  %v2870 = vpop.f32.mrb[0].mxu0
  %v2871 = vadd.f32 %v2426, %v2870
  %v2872 = vpop.f32.mrb[0].mxu0
  %v2873 = vadd.f32 %v2430, %v2872
  %v2874 = vpop.f32.mrb[0].mxu0
  %v2875 = vpop.f32.mrb[0].mxu0
  %2876 = vdwg.mxu0
  %2877 = vst [vmem:[%s11] sm:$0xff] %v2790
  %2878 = vst [vmem:[%s11 + $0x8] sm:$0xff] %v2792
  %2879 = vst [vmem:[%s11 + $0x10] sm:$0xff] %v2851
  %2880 = vst [vmem:[%s11 + $0x18] sm:$0xff] %v2853
  %2881 = vst [vmem:[%s11 + $0x20] sm:$0xff] %v2794
  %2882 = vst [vmem:[%s11 + $0x28] sm:$0xff] %v2796
  %2883 = vst [vmem:[%s11 + $0x30] sm:$0xff] %v2855
  %2884 = vst [vmem:[%s11 + $0x38] sm:$0xff] %v2857
  %2885 = vst [vmem:[%s11 + $0x40] sm:$0xff] %v2800
  %2886 = vst [vmem:[%s11 + $0x48] sm:$0xff] %v2802
  %2887 = vst [vmem:[%s11 + $0x50] sm:$0xff] %v2861
  %2888 = vst [vmem:[%s11 + $0x58] sm:$0xff] %v2863
  %2889 = vst [vmem:[%s11 + $0x60] sm:$0xff] %v2804
  %2890 = vst [vmem:[%s11 + $0x68] sm:$0xff] %v2806
  %2891 = vst [vmem:[%s11 + $0x70] sm:$0xff] %v2865
  %2892 = vst [vmem:[%s11 + $0x78] sm:$0xff] %v2867
  %2893 = vst [vmem:[%s11 + $0x80] sm:$0x3] %v2810
  %2894 = vst [vmem:[%s11 + $0x88] sm:$0x3] %v2812
  %2895 = vst [vmem:[%s11 + $0x90] sm:$0x3] %v2871
  %2896 = vst [vmem:[%s11 + $0x98] sm:$0x3] %v2873
  // Predicated region
  $region46: #{_lambda_.1} parent=0 // pred_check
    _
  $region47: #{_lambda_.1} parent=0 // pred_check_branch
    %2898 = sbr.rel (0) target = $region49
  $region48: #{_lambda_.1} parent=0 // pred_region
    _
  $region49: #{_lambda_.1} parent=0 // pred_fallthru
    _
  // Predicated region
  $region50: #{_lambda_.1} parent=0 // pred_check
    _
  $region51: #{_lambda_.1} parent=0 // pred_check_branch
    %2900 = sbr.rel (0) target = $region53
  $region52: #{_lambda_.1} parent=0 // pred_region
    _
  $region53: #{_lambda_.1} parent=0 // pred_fallthru
    _

</llo_original>
